<compile_context>
chip_gen: v5e
topology: v5e:2x2
jax: 0.10.0
libtpu: 0.0.40
codegen_flags: <defaults>
</compile_context>

<pallas_src>
import functools

import jax
import jax.numpy as jnp
from jax import lax
from jax.experimental import pallas as pl
from jax.experimental.pallas import tpu as pltpu

KSIZE = 7
PAD = 3


def _spatial_attention_kernel(w_ref, x_ref, o_ref, sum_ref, max_ref, feat_ref,
                              *, H, W, C, CT, CH, ragged):
    """Grid = (batch, channel-tile); the channel-tile axis is the reduction axis.

    w_ref   : SMEM f32[2*7*7]        conv taps, OIHW-flat; avg taps pre-scaled by 1/C
    x_ref   : VMEM [1, CT, H*W]      lane-dense channel tile of the input
    o_ref   : VMEM [1, 1, H, W]      sigmoid(conv) output (resident across CT axis)
    sum_ref : VMEM f32[1, H*W]       running channel sum   (scratch, lane-dense)
    max_ref : VMEM f32[1, H*W]       running channel max   (scratch, lane-dense)
    feat_ref: VMEM f32[H+6, 2*(W+6)] zero-padded [avg | max] slabs (scratch)
    """
    HW = H * W
    Hp, Wp = H + 2 * PAD, W + 2 * PAD
    ci = pl.program_id(1)
    nct = pl.num_programs(1)

    # ---- init on the first channel tile of each batch element -----------------
    # Zeroing the whole feat slab here (rather than only once for the whole grid)
    # keeps the halo correct even when the batch axis is sharded across cores;
    # it costs one tiny store per batch and overlaps the first input DMA.
    @pl.when(ci == 0)
    def _():
        sum_ref[...] = jnp.zeros_like(sum_ref)
        max_ref[...] = jnp.full(max_ref.shape, -jnp.inf, max_ref.dtype)
        feat_ref[...] = jnp.zeros_like(feat_ref)

    # ---- streaming reduction over this channel tile ---------------------------
    # CH channels per scratch update -> the vld/vst slots stay far from
    # saturation and the f32 upcast temporary is only (CH, HW).
    nchunks = CT // CH
    for j in range(nchunks):
        v = x_ref[0, j * CH:(j + 1) * CH, :].astype(jnp.float32)   # (CH, HW)
        if ragged:
            # Mask channels beyond C (the padded part of an edge block holds
            # garbage, possibly NaN; where() never propagates it).
            idx = ci * CT + j * CH + lax.broadcasted_iota(jnp.int32, (CH, 1), 0)
            valid = idx < C
            vs = jnp.where(valid, v, 0.0)
            vm = jnp.where(valid, v, -jnp.inf)
        else:
            vs = vm = v
        sum_ref[...] = sum_ref[...] + jnp.sum(vs, axis=0, keepdims=True)
        max_ref[...] = jnp.maximum(max_ref[...], jnp.max(vm, axis=0, keepdims=True))

    # ---- finalize on the last channel tile: 7x7 conv (MXU) + sigmoid ----------
    @pl.when(ci == nct - 1)
    def _():
        # Single small relayout of the lane-dense running maps into the padded
        # 2-D slab (static row slices only; the 1/C factor lives in the taps).
        for h in range(H):
            src = slice(h * W, (h + 1) * W)
            dst = slice(PAD + h, PAD + h + 1)
            feat_ref[dst, PAD:PAD + W] = sum_ref[:, src]
            feat_ref[dst, Wp + PAD:Wp + PAD + W] = max_ref[:, src]

        # Hoist all 2*7*7 scalar weight reads out of the strip/kh loops.
        taps = [[[w_ref[c * KSIZE * KSIZE + kh * KSIZE + kw]
                  for kw in range(KSIZE)]
                 for kh in range(KSIZE)] for c in range(2)]

        # Banded weight matrix for one kh: rows [0, Wp) carry the avg-channel
        # taps, rows [Wp, 2*Wp) the max-channel taps, so one (rs, 2*Wp) @
        # (2*Wp, W) MXU matmul applies both channels' 7 kw taps at once.
        p_i = lax.broadcasted_iota(jnp.int32, (2 * Wp, W), 0)
        w_i = lax.broadcasted_iota(jnp.int32, (2 * Wp, W), 1)
        d0 = p_i - w_i          # == kw  only possible for rows p <  Wp
        d1 = d0 - Wp            # == kw  only possible for rows p >= Wp

        def band(kh):
            b = jnp.zeros((2 * Wp, W), jnp.float32)
            for kw in range(KSIZE):
                b = jnp.where(d0 == kw, taps[0][kh][kw], b)
                b = jnp.where(d1 == kw, taps[1][kh][kw], b)
            return b

        # Strip-mine output rows to bound operand/accumulator pressure.
        rs_max = min(H, 64)
        for r0 in range(0, H, rs_max):
            rs = min(rs_max, H - r0)
            acc = jnp.zeros((rs, W), jnp.float32)
            for kh in range(KSIZE):
                rows = feat_ref[r0 + kh:r0 + kh + rs, :]          # (rs, 2*Wp)
                acc = acc + jnp.dot(rows, band(kh),
                                    preferred_element_type=jnp.float32)
            # Output stores happen once per batch at finalize, so the 4-D
            # (H, W) layout costs nothing measurable; HBM bytes are identical
            # to a flat (1, H*W) slab.
            o_ref[0, 0, r0:r0 + rs, :] = jax.nn.sigmoid(acc).astype(o_ref.dtype)


def spatial_attention(x, weight, *, channel_tile=None):
    """x: [N, C, H, W] (NCHW), weight: [1, 2, 7, 7] (OIHW). Returns [N, 1, H, W].

    If channel_tile is given it should be a multiple of 8 or equal to C.
    """
    N, C, H, W = x.shape
    HW = H * W
    Hp, Wp = H + 2 * PAD, W + 2 * PAD
    itemsize = x.dtype.itemsize

    # Per-generation block budget: ~8 MiB/buffer on 128 MiB VMEM (v5e/v6e),
    # ~4 MiB on 64 MiB (v7x).
    try:
        vmem_cap = int(pltpu.get_tpu_info().vmem_capacity_bytes)
    except Exception:  # pragma: no cover - conservative fallback
        vmem_cap = 64 * 1024 * 1024
    per_buf = max(4 * 1024 * 1024, vmem_cap // 16)

    if channel_tile is not None:
        CT = int(min(channel_tile, C))
    else:
        ct_max = max(1, per_buf // (HW * itemsize))
        if C <= 8 or ct_max >= C:
            CT = C
        else:
            ct_aligned = max(8, (ct_max // 8) * 8)     # keep second-minor dim 8-aligned
            CT = 0
            for cand in range(ct_aligned, 7, -8):      # prefer an exact divisor of C
                if C % cand == 0:
                    CT = cand
                    break
            if CT == 0 or CT < ct_aligned // 2:
                CT = ct_aligned                         # ragged last tile, masked in-kernel
    num_ct = pl.cdiv(C, CT)
    ragged = (C % CT) != 0
    # Channels accumulated per scratch update inside the kernel.
    CH = next(d for d in range(min(CT, 8), 0, -1) if CT % d == 0)

    # Fold the 1/C mean normalization into the avg-channel taps (conv is linear):
    # conv([sum/C, max]) == conv_with_scaled_avg_taps([sum, max]).
    w = weight.astype(jnp.float32)
    w = w.at[:, 0, :, :].multiply(1.0 / C)
    w_flat = w.reshape(-1)

    # Lane-dense view of the input: NCHW is contiguous, so this reshape is free
    # and puts H*W (not W alone) on the 128-lane axis.
    x_flat = x.reshape(N, C, HW)

    kernel = functools.partial(_spatial_attention_kernel, H=H, W=W, C=C,
                               CT=CT, CH=CH, ragged=ragged)

    in_block = CT * HW * itemsize
    scratch_bytes = (2 * 8 * pl.cdiv(HW, 128) * 128 * 4                 # sum/max
                     + (Hp + 8) * pl.cdiv(2 * Wp, 128) * 128 * 4)       # feat slab
    vmem_limit = min(vmem_cap,
                     max(32 * 1024 * 1024,
                         2 * in_block + scratch_bytes + 8 * 1024 * 1024))

    cost = pl.CostEstimate(
        flops=int(N * HW * (2 * C + 4 * KSIZE * KSIZE)),
        transcendentals=int(N * HW),
        bytes_accessed=int(N * C * HW * itemsize + N * HW * itemsize
                           + w_flat.size * 4),
    )

    return pl.pallas_call(
        kernel,
        out_shape=jax.ShapeDtypeStruct((N, 1, H, W), x.dtype),
        grid=(N, num_ct),
        in_specs=[
            pl.BlockSpec(memory_space=pltpu.MemorySpace.SMEM),        # conv taps
            pl.BlockSpec((1, CT, HW), lambda n, c: (n, c, 0)),        # channel tile
        ],
        out_specs=pl.BlockSpec((1, 1, H, W), lambda n, c: (n, 0, 0, 0)),
        scratch_shapes=[
            pltpu.VMEM((1, HW), jnp.float32),          # running channel sum
            pltpu.VMEM((1, HW), jnp.float32),          # running channel max
            pltpu.VMEM((Hp, 2 * Wp), jnp.float32),     # padded [avg | max] slab
        ],
        compiler_params=pltpu.CompilerParams(
            dimension_semantics=("parallel", "arbitrary"),
            vmem_limit_bytes=int(vmem_limit)),
        cost_estimate=cost,
    )(w_flat, x_flat)


def _reference(x, weight):
    avg = jnp.mean(x, axis=1, keepdims=True)
    mx = jnp.max(x, axis=1, keepdims=True)
    cat = jnp.concatenate([avg, mx], axis=1)
    out = jax.lax.conv_general_dilated(
        cat, weight, window_strides=(1, 1), padding=((PAD, PAD), (PAD, PAD)),
        dimension_numbers=("NCHW", "OIHW", "NCHW"))
    return jax.nn.sigmoid(out)


if __name__ == "__main__":
    key = jax.random.PRNGKey(0)
    kx, kw, kx2 = jax.random.split(key, 3)

    # Shapes consistent with fusionspatial inside Ma_Net (channel reduce +
    # 7x7 conv on a small spatial map); C=64 matches the shallowest fusion stage.
    N, C, H, W = 2, 64, 16, 16
    x = jax.random.normal(kx, (N, C, H, W), dtype=jnp.float32)
    # Deterministic synthetic conv weight, shape per nn.Conv2d(2, 1, 7, bias=False).
    weight = jax.random.normal(kw, (1, 2, KSIZE, KSIZE), dtype=jnp.float32) * 0.1

    # channel_tile=16 exercises the multi-tile accumulation path (4 grid steps
    # along the channel axis, 2 chunks per step).
    out = jax.block_until_ready(spatial_attention(x, weight, channel_tile=16))
    ref = jax.block_until_ready(_reference(x, weight))
    assert out.shape == (N, 1, H, W), out.shape
    assert jnp.allclose(out, ref, atol=1e-4, rtol=1e-4), "mismatch vs reference"

    # Ragged channel count exercises the masked last-tile path (12 = 8 + 4).
    x2 = jax.random.normal(kx2, (N, 12, H, W), dtype=jnp.float32)
    out2 = jax.block_until_ready(spatial_attention(x2, weight, channel_tile=8))
    ref2 = jax.block_until_ready(_reference(x2, weight))
    assert jnp.allclose(out2, ref2, atol=1e-4, rtol=1e-4), "ragged mismatch"

    print("KERNEL_OK")
</pallas_src>

<mosaic_0001>
module attributes {stable_mosaic.version = 11 : i64} {
  func.func @_spatial_attention_kernel(%arg0: i32, %arg1: i32, %arg2: memref<98xf32, #tpu.memory_space<smem>>, %arg3: memref<1x16x256xf32, #tpu.memory_space<vmem>>, %arg4: memref<1x1x16x16xf32, #tpu.memory_space<vmem>>, %arg5: memref<1x256xf32, #tpu.memory_space<vmem>>, %arg6: memref<1x256xf32, #tpu.memory_space<vmem>>, %arg7: memref<22x44xf32, #tpu.memory_space<vmem>>) attributes {dimension_semantics = [#tpu.dimension_semantics<parallel>, #tpu.dimension_semantics<arbitrary>], iteration_bounds = array<i64: 2, 4>, scalar_prefetch = 0 : i64, scratch_operands = 3 : i64, tpu.core_type = #tpu.core_type<tc>, window_params = [{transform_indices = @transform_0, window_bounds = array<i64: 98>}, {transform_indices = @transform_1, window_bounds = array<i64: 1, 16, 256>}, {transform_indices = @transform_2, window_bounds = array<i64: 1, 1, 16, 16>}]} {
    %c0_i32 = arith.constant 0 : i32
    %0 = arith.cmpi eq, %arg1, %c0_i32 : i32
    %1 = arith.extui %0 : i1 to i32
    %c0_i32_0 = arith.constant 0 : i32
    %2 = arith.cmpi ne, %1, %c0_i32_0 : i32
    scf.if %2 {
      %cst_25 = arith.constant 0.000000e+00 : f32
      %30 = vector.broadcast %cst_25 : f32 to vector<1x256xf32>
      %c0_26 = arith.constant 0 : index
      %c0_27 = arith.constant 0 : index
      %31 = vector.load %arg5[%c0_26, %c0_27] : memref<1x256xf32, #tpu.memory_space<vmem>>, vector<1x256xf32>
      tpu.vector_store %arg5[%c0_26, %c0_27], %30 {strides = array<i32>} : memref<1x256xf32, #tpu.memory_space<vmem>>, vector<1x256xf32>,
      %cst_28 = arith.constant 0xFF800000 : f32
      %32 = vector.broadcast %cst_28 : f32 to vector<1x256xf32>
      %c0_29 = arith.constant 0 : index
      %c0_30 = arith.constant 0 : index
      %33 = vector.load %arg6[%c0_29, %c0_30] : memref<1x256xf32, #tpu.memory_space<vmem>>, vector<1x256xf32>
      tpu.vector_store %arg6[%c0_29, %c0_30], %32 {strides = array<i32>} : memref<1x256xf32, #tpu.memory_space<vmem>>, vector<1x256xf32>,
      %cst_31 = arith.constant 0.000000e+00 : f32
      %34 = vector.broadcast %cst_31 : f32 to vector<22x44xf32>
      %c0_32 = arith.constant 0 : index
      %c0_33 = arith.constant 0 : index
      %35 = vector.load %arg7[%c0_32, %c0_33] : memref<22x44xf32, #tpu.memory_space<vmem>>, vector<22x44xf32>
      tpu.vector_store %arg7[%c0_32, %c0_33], %34 {strides = array<i32>} : memref<22x44xf32, #tpu.memory_space<vmem>>, vector<22x44xf32>,
    } else {
    }
    %c0 = arith.constant 0 : index
    %c0_1 = arith.constant 0 : index
    %c0_2 = arith.constant 0 : index
    %3 = vector.load %arg3[%c0, %c0_1, %c0_2] : memref<1x16x256xf32, #tpu.memory_space<vmem>>, vector<1x8x256xf32>
    %4 = vector.shape_cast %3 : vector<1x8x256xf32> to vector<8x256xf32>
    %c0_3 = arith.constant 0 : index
    %c0_4 = arith.constant 0 : index
    %5 = vector.load %arg5[%c0_3, %c0_4] : memref<1x256xf32, #tpu.memory_space<vmem>>, vector<1x256xf32>
    %cst = arith.constant dense<0.000000e+00> : vector<256xf32>
    %6 = vector.multi_reduction <add>, %4, %cst [0] : vector<8x256xf32> to vector<256xf32>
    %7 = vector.shape_cast %6 : vector<256xf32> to vector<1x256xf32>
    %8 = arith.addf %5, %7 : vector<1x256xf32>
    %c0_5 = arith.constant 0 : index
    %c0_6 = arith.constant 0 : index
    %9 = vector.load %arg5[%c0_5, %c0_6] : memref<1x256xf32, #tpu.memory_space<vmem>>, vector<1x256xf32>
    tpu.vector_store %arg5[%c0_5, %c0_6], %8 {strides = array<i32>} : memref<1x256xf32, #tpu.memory_space<vmem>>, vector<1x256xf32>,
    %c0_7 = arith.constant 0 : index
    %c0_8 = arith.constant 0 : index
    %10 = vector.load %arg6[%c0_7, %c0_8] : memref<1x256xf32, #tpu.memory_space<vmem>>, vector<1x256xf32>
    %cst_9 = arith.constant dense<0xFF800000> : vector<256xf32>
    %11 = vector.multi_reduction <maximumf>, %4, %cst_9 [0] : vector<8x256xf32> to vector<256xf32>
    %12 = vector.shape_cast %11 : vector<256xf32> to vector<1x256xf32>
    %13 = arith.maximumf %10, %12 : vector<1x256xf32>
    %c0_10 = arith.constant 0 : index
    %c0_11 = arith.constant 0 : index
    %14 = vector.load %arg6[%c0_10, %c0_11] : memref<1x256xf32, #tpu.memory_space<vmem>>, vector<1x256xf32>
    tpu.vector_store %arg6[%c0_10, %c0_11], %13 {strides = array<i32>} : memref<1x256xf32, #tpu.memory_space<vmem>>, vector<1x256xf32>,
    %c0_12 = arith.constant 0 : index
    %c8 = arith.constant 8 : index
    %c0_13 = arith.constant 0 : index
    %15 = vector.load %arg3[%c0_12, %c8, %c0_13] : memref<1x16x256xf32, #tpu.memory_space<vmem>>, vector<1x8x256xf32>
    %16 = vector.shape_cast %15 : vector<1x8x256xf32> to vector<8x256xf32>
    %c0_14 = arith.constant 0 : index
    %c0_15 = arith.constant 0 : index
    %17 = vector.load %arg5[%c0_14, %c0_15] : memref<1x256xf32, #tpu.memory_space<vmem>>, vector<1x256xf32>
    %cst_16 = arith.constant dense<0.000000e+00> : vector<256xf32>
    %18 = vector.multi_reduction <add>, %16, %cst_16 [0] : vector<8x256xf32> to vector<256xf32>
    %19 = vector.shape_cast %18 : vector<256xf32> to vector<1x256xf32>
    %20 = arith.addf %17, %19 : vector<1x256xf32>
    %c0_17 = arith.constant 0 : index
    %c0_18 = arith.constant 0 : index
    %21 = vector.load %arg5[%c0_17, %c0_18] : memref<1x256xf32, #tpu.memory_space<vmem>>, vector<1x256xf32>
    tpu.vector_store %arg5[%c0_17, %c0_18], %20 {strides = array<i32>} : memref<1x256xf32, #tpu.memory_space<vmem>>, vector<1x256xf32>,
    %c0_19 = arith.constant 0 : index
    %c0_20 = arith.constant 0 : index
    %22 = vector.load %arg6[%c0_19, %c0_20] : memref<1x256xf32, #tpu.memory_space<vmem>>, vector<1x256xf32>
    %cst_21 = arith.constant dense<0xFF800000> : vector<256xf32>
    %23 = vector.multi_reduction <maximumf>, %16, %cst_21 [0] : vector<8x256xf32> to vector<256xf32>
    %24 = vector.shape_cast %23 : vector<256xf32> to vector<1x256xf32>
    %25 = arith.maximumf %22, %24 : vector<1x256xf32>
    %c0_22 = arith.constant 0 : index
    %c0_23 = arith.constant 0 : index
    %26 = vector.load %arg6[%c0_22, %c0_23] : memref<1x256xf32, #tpu.memory_space<vmem>>, vector<1x256xf32>
    tpu.vector_store %arg6[%c0_22, %c0_23], %25 {strides = array<i32>} : memref<1x256xf32, #tpu.memory_space<vmem>>, vector<1x256xf32>,
    %c3_i32 = arith.constant 3 : i32
    %27 = arith.cmpi eq, %arg1, %c3_i32 : i32
    %28 = arith.extui %27 : i1 to i32
    %c0_i32_24 = arith.constant 0 : i32
    %29 = arith.cmpi ne, %28, %c0_i32_24 : i32
    scf.if %29 {
      %c0_25 = arith.constant 0 : index
      %c0_26 = arith.constant 0 : index
      %30 = vector.load %arg5[%c0_25, %c0_26] : memref<1x256xf32, #tpu.memory_space<vmem>>, vector<1x16xf32>
      %c3 = arith.constant 3 : index
      %c3_27 = arith.constant 3 : index
      %31 = vector.load %arg7[%c3, %c3_27] : memref<22x44xf32, #tpu.memory_space<vmem>>, vector<1x16xf32>
      tpu.vector_store %arg7[%c3, %c3_27], %30 {strides = array<i32>} : memref<22x44xf32, #tpu.memory_space<vmem>>, vector<1x16xf32>,
      %c0_28 = arith.constant 0 : index
      %c0_29 = arith.constant 0 : index
      %32 = vector.load %arg6[%c0_28, %c0_29] : memref<1x256xf32, #tpu.memory_space<vmem>>, vector<1x16xf32>
      %c3_30 = arith.constant 3 : index
      %c25 = arith.constant 25 : index
      %33 = vector.load %arg7[%c3_30, %c25] : memref<22x44xf32, #tpu.memory_space<vmem>>, vector<1x16xf32>
      tpu.vector_store %arg7[%c3_30, %c25], %32 {strides = array<i32>} : memref<22x44xf32, #tpu.memory_space<vmem>>, vector<1x16xf32>,
      %c0_31 = arith.constant 0 : index
      %c16 = arith.constant 16 : index
      %34 = vector.load %arg5[%c0_31, %c16] : memref<1x256xf32, #tpu.memory_space<vmem>>, vector<1x16xf32>
      %c4 = arith.constant 4 : index
      %c3_32 = arith.constant 3 : index
      %35 = vector.load %arg7[%c4, %c3_32] : memref<22x44xf32, #tpu.memory_space<vmem>>, vector<1x16xf32>
      tpu.vector_store %arg7[%c4, %c3_32], %34 {strides = array<i32>} : memref<22x44xf32, #tpu.memory_space<vmem>>, vector<1x16xf32>,
      %c0_33 = arith.constant 0 : index
      %c16_34 = arith.constant 16 : index
      %36 = vector.load %arg6[%c0_33, %c16_34] : memref<1x256xf32, #tpu.memory_space<vmem>>, vector<1x16xf32>
      %c4_35 = arith.constant 4 : index
      %c25_36 = arith.constant 25 : index
      %37 = vector.load %arg7[%c4_35, %c25_36] : memref<22x44xf32, #tpu.memory_space<vmem>>, vector<1x16xf32>
      tpu.vector_store %arg7[%c4_35, %c25_36], %36 {strides = array<i32>} : memref<22x44xf32, #tpu.memory_space<vmem>>, vector<1x16xf32>,
      %c0_37 = arith.constant 0 : index
      %c32 = arith.constant 32 : index
      %38 = vector.load %arg5[%c0_37, %c32] : memref<1x256xf32, #tpu.memory_space<vmem>>, vector<1x16xf32>
      %c5 = arith.constant 5 : index
      %c3_38 = arith.constant 3 : index
      %39 = vector.load %arg7[%c5, %c3_38] : memref<22x44xf32, #tpu.memory_space<vmem>>, vector<1x16xf32>
      tpu.vector_store %arg7[%c5, %c3_38], %38 {strides = array<i32>} : memref<22x44xf32, #tpu.memory_space<vmem>>, vector<1x16xf32>,
      %c0_39 = arith.constant 0 : index
      %c32_40 = arith.constant 32 : index
      %40 = vector.load %arg6[%c0_39, %c32_40] : memref<1x256xf32, #tpu.memory_space<vmem>>, vector<1x16xf32>
      %c5_41 = arith.constant 5 : index
      %c25_42 = arith.constant 25 : index
      %41 = vector.load %arg7[%c5_41, %c25_42] : memref<22x44xf32, #tpu.memory_space<vmem>>, vector<1x16xf32>
      tpu.vector_store %arg7[%c5_41, %c25_42], %40 {strides = array<i32>} : memref<22x44xf32, #tpu.memory_space<vmem>>, vector<1x16xf32>,
      %c0_43 = arith.constant 0 : index
      %c48 = arith.constant 48 : index
      %42 = vector.load %arg5[%c0_43, %c48] : memref<1x256xf32, #tpu.memory_space<vmem>>, vector<1x16xf32>
      %c6 = arith.constant 6 : index
      %c3_44 = arith.constant 3 : index
      %43 = vector.load %arg7[%c6, %c3_44] : memref<22x44xf32, #tpu.memory_space<vmem>>, vector<1x16xf32>
      tpu.vector_store %arg7[%c6, %c3_44], %42 {strides = array<i32>} : memref<22x44xf32, #tpu.memory_space<vmem>>, vector<1x16xf32>,
      %c0_45 = arith.constant 0 : index
      %c48_46 = arith.constant 48 : index
      %44 = vector.load %arg6[%c0_45, %c48_46] : memref<1x256xf32, #tpu.memory_space<vmem>>, vector<1x16xf32>
      %c6_47 = arith.constant 6 : index
      %c25_48 = arith.constant 25 : index
      %45 = vector.load %arg7[%c6_47, %c25_48] : memref<22x44xf32, #tpu.memory_space<vmem>>, vector<1x16xf32>
      tpu.vector_store %arg7[%c6_47, %c25_48], %44 {strides = array<i32>} : memref<22x44xf32, #tpu.memory_space<vmem>>, vector<1x16xf32>,
      %c0_49 = arith.constant 0 : index
      %c64 = arith.constant 64 : index
      %46 = vector.load %arg5[%c0_49, %c64] : memref<1x256xf32, #tpu.memory_space<vmem>>, vector<1x16xf32>
      %c7 = arith.constant 7 : index
      %c3_50 = arith.constant 3 : index
      %47 = vector.load %arg7[%c7, %c3_50] : memref<22x44xf32, #tpu.memory_space<vmem>>, vector<1x16xf32>
      tpu.vector_store %arg7[%c7, %c3_50], %46 {strides = array<i32>} : memref<22x44xf32, #tpu.memory_space<vmem>>, vector<1x16xf32>,
      %c0_51 = arith.constant 0 : index
      %c64_52 = arith.constant 64 : index
      %48 = vector.load %arg6[%c0_51, %c64_52] : memref<1x256xf32, #tpu.memory_space<vmem>>, vector<1x16xf32>
      %c7_53 = arith.constant 7 : index
      %c25_54 = arith.constant 25 : index
      %49 = vector.load %arg7[%c7_53, %c25_54] : memref<22x44xf32, #tpu.memory_space<vmem>>, vector<1x16xf32>
      tpu.vector_store %arg7[%c7_53, %c25_54], %48 {strides = array<i32>} : memref<22x44xf32, #tpu.memory_space<vmem>>, vector<1x16xf32>,
      %c0_55 = arith.constant 0 : index
      %c80 = arith.constant 80 : index
      %50 = vector.load %arg5[%c0_55, %c80] : memref<1x256xf32, #tpu.memory_space<vmem>>, vector<1x16xf32>
      %c8_56 = arith.constant 8 : index
      %c3_57 = arith.constant 3 : index
      %51 = vector.load %arg7[%c8_56, %c3_57] : memref<22x44xf32, #tpu.memory_space<vmem>>, vector<1x16xf32>
      tpu.vector_store %arg7[%c8_56, %c3_57], %50 {strides = array<i32>} : memref<22x44xf32, #tpu.memory_space<vmem>>, vector<1x16xf32>,
      %c0_58 = arith.constant 0 : index
      %c80_59 = arith.constant 80 : index
      %52 = vector.load %arg6[%c0_58, %c80_59] : memref<1x256xf32, #tpu.memory_space<vmem>>, vector<1x16xf32>
      %c8_60 = arith.constant 8 : index
      %c25_61 = arith.constant 25 : index
      %53 = vector.load %arg7[%c8_60, %c25_61] : memref<22x44xf32, #tpu.memory_space<vmem>>, vector<1x16xf32>
      tpu.vector_store %arg7[%c8_60, %c25_61], %52 {strides = array<i32>} : memref<22x44xf32, #tpu.memory_space<vmem>>, vector<1x16xf32>,
      %c0_62 = arith.constant 0 : index
      %c96 = arith.constant 96 : index
      %54 = vector.load %arg5[%c0_62, %c96] : memref<1x256xf32, #tpu.memory_space<vmem>>, vector<1x16xf32>
      %c9 = arith.constant 9 : index
      %c3_63 = arith.constant 3 : index
      %55 = vector.load %arg7[%c9, %c3_63] : memref<22x44xf32, #tpu.memory_space<vmem>>, vector<1x16xf32>
      tpu.vector_store %arg7[%c9, %c3_63], %54 {strides = array<i32>} : memref<22x44xf32, #tpu.memory_space<vmem>>, vector<1x16xf32>,
      %c0_64 = arith.constant 0 : index
      %c96_65 = arith.constant 96 : index
      %56 = vector.load %arg6[%c0_64, %c96_65] : memref<1x256xf32, #tpu.memory_space<vmem>>, vector<1x16xf32>
      %c9_66 = arith.constant 9 : index
      %c25_67 = arith.constant 25 : index
      %57 = vector.load %arg7[%c9_66, %c25_67] : memref<22x44xf32, #tpu.memory_space<vmem>>, vector<1x16xf32>
      tpu.vector_store %arg7[%c9_66, %c25_67], %56 {strides = array<i32>} : memref<22x44xf32, #tpu.memory_space<vmem>>, vector<1x16xf32>,
      %c0_68 = arith.constant 0 : index
      %c112 = arith.constant 112 : index
      %58 = vector.load %arg5[%c0_68, %c112] : memref<1x256xf32, #tpu.memory_space<vmem>>, vector<1x16xf32>
      %c10 = arith.constant 10 : index
      %c3_69 = arith.constant 3 : index
      %59 = vector.load %arg7[%c10, %c3_69] : memref<22x44xf32, #tpu.memory_space<vmem>>, vector<1x16xf32>
      tpu.vector_store %arg7[%c10, %c3_69], %58 {strides = array<i32>} : memref<22x44xf32, #tpu.memory_space<vmem>>, vector<1x16xf32>,
      %c0_70 = arith.constant 0 : index
      %c112_71 = arith.constant 112 : index
      %60 = vector.load %arg6[%c0_70, %c112_71] : memref<1x256xf32, #tpu.memory_space<vmem>>, vector<1x16xf32>
      %c10_72 = arith.constant 10 : index
      %c25_73 = arith.constant 25 : index
      %61 = vector.load %arg7[%c10_72, %c25_73] : memref<22x44xf32, #tpu.memory_space<vmem>>, vector<1x16xf32>
      tpu.vector_store %arg7[%c10_72, %c25_73], %60 {strides = array<i32>} : memref<22x44xf32, #tpu.memory_space<vmem>>, vector<1x16xf32>,
      %c0_74 = arith.constant 0 : index
      %c128 = arith.constant 128 : index
      %62 = vector.load %arg5[%c0_74, %c128] : memref<1x256xf32, #tpu.memory_space<vmem>>, vector<1x16xf32>
      %c11 = arith.constant 11 : index
      %c3_75 = arith.constant 3 : index
      %63 = vector.load %arg7[%c11, %c3_75] : memref<22x44xf32, #tpu.memory_space<vmem>>, vector<1x16xf32>
      tpu.vector_store %arg7[%c11, %c3_75], %62 {strides = array<i32>} : memref<22x44xf32, #tpu.memory_space<vmem>>, vector<1x16xf32>,
      %c0_76 = arith.constant 0 : index
      %c128_77 = arith.constant 128 : index
      %64 = vector.load %arg6[%c0_76, %c128_77] : memref<1x256xf32, #tpu.memory_space<vmem>>, vector<1x16xf32>
      %c11_78 = arith.constant 11 : index
      %c25_79 = arith.constant 25 : index
      %65 = vector.load %arg7[%c11_78, %c25_79] : memref<22x44xf32, #tpu.memory_space<vmem>>, vector<1x16xf32>
      tpu.vector_store %arg7[%c11_78, %c25_79], %64 {strides = array<i32>} : memref<22x44xf32, #tpu.memory_space<vmem>>, vector<1x16xf32>,
      %c0_80 = arith.constant 0 : index
      %c144 = arith.constant 144 : index
      %66 = vector.load %arg5[%c0_80, %c144] : memref<1x256xf32, #tpu.memory_space<vmem>>, vector<1x16xf32>
      %c12 = arith.constant 12 : index
      %c3_81 = arith.constant 3 : index
      %67 = vector.load %arg7[%c12, %c3_81] : memref<22x44xf32, #tpu.memory_space<vmem>>, vector<1x16xf32>
      tpu.vector_store %arg7[%c12, %c3_81], %66 {strides = array<i32>} : memref<22x44xf32, #tpu.memory_space<vmem>>, vector<1x16xf32>,
      %c0_82 = arith.constant 0 : index
      %c144_83 = arith.constant 144 : index
      %68 = vector.load %arg6[%c0_82, %c144_83] : memref<1x256xf32, #tpu.memory_space<vmem>>, vector<1x16xf32>
      %c12_84 = arith.constant 12 : index
      %c25_85 = arith.constant 25 : index
      %69 = vector.load %arg7[%c12_84, %c25_85] : memref<22x44xf32, #tpu.memory_space<vmem>>, vector<1x16xf32>
      tpu.vector_store %arg7[%c12_84, %c25_85], %68 {strides = array<i32>} : memref<22x44xf32, #tpu.memory_space<vmem>>, vector<1x16xf32>,
      %c0_86 = arith.constant 0 : index
      %c160 = arith.constant 160 : index
      %70 = vector.load %arg5[%c0_86, %c160] : memref<1x256xf32, #tpu.memory_space<vmem>>, vector<1x16xf32>
      %c13 = arith.constant 13 : index
      %c3_87 = arith.constant 3 : index
      %71 = vector.load %arg7[%c13, %c3_87] : memref<22x44xf32, #tpu.memory_space<vmem>>, vector<1x16xf32>
      tpu.vector_store %arg7[%c13, %c3_87], %70 {strides = array<i32>} : memref<22x44xf32, #tpu.memory_space<vmem>>, vector<1x16xf32>,
      %c0_88 = arith.constant 0 : index
      %c160_89 = arith.constant 160 : index
      %72 = vector.load %arg6[%c0_88, %c160_89] : memref<1x256xf32, #tpu.memory_space<vmem>>, vector<1x16xf32>
      %c13_90 = arith.constant 13 : index
      %c25_91 = arith.constant 25 : index
      %73 = vector.load %arg7[%c13_90, %c25_91] : memref<22x44xf32, #tpu.memory_space<vmem>>, vector<1x16xf32>
      tpu.vector_store %arg7[%c13_90, %c25_91], %72 {strides = array<i32>} : memref<22x44xf32, #tpu.memory_space<vmem>>, vector<1x16xf32>,
      %c0_92 = arith.constant 0 : index
      %c176 = arith.constant 176 : index
      %74 = vector.load %arg5[%c0_92, %c176] : memref<1x256xf32, #tpu.memory_space<vmem>>, vector<1x16xf32>
      %c14 = arith.constant 14 : index
      %c3_93 = arith.constant 3 : index
      %75 = vector.load %arg7[%c14, %c3_93] : memref<22x44xf32, #tpu.memory_space<vmem>>, vector<1x16xf32>
      tpu.vector_store %arg7[%c14, %c3_93], %74 {strides = array<i32>} : memref<22x44xf32, #tpu.memory_space<vmem>>, vector<1x16xf32>,
      %c0_94 = arith.constant 0 : index
      %c176_95 = arith.constant 176 : index
      %76 = vector.load %arg6[%c0_94, %c176_95] : memref<1x256xf32, #tpu.memory_space<vmem>>, vector<1x16xf32>
      %c14_96 = arith.constant 14 : index
      %c25_97 = arith.constant 25 : index
      %77 = vector.load %arg7[%c14_96, %c25_97] : memref<22x44xf32, #tpu.memory_space<vmem>>, vector<1x16xf32>
      tpu.vector_store %arg7[%c14_96, %c25_97], %76 {strides = array<i32>} : memref<22x44xf32, #tpu.memory_space<vmem>>, vector<1x16xf32>,
      %c0_98 = arith.constant 0 : index
      %c192 = arith.constant 192 : index
      %78 = vector.load %arg5[%c0_98, %c192] : memref<1x256xf32, #tpu.memory_space<vmem>>, vector<1x16xf32>
      %c15 = arith.constant 15 : index
      %c3_99 = arith.constant 3 : index
      %79 = vector.load %arg7[%c15, %c3_99] : memref<22x44xf32, #tpu.memory_space<vmem>>, vector<1x16xf32>
      tpu.vector_store %arg7[%c15, %c3_99], %78 {strides = array<i32>} : memref<22x44xf32, #tpu.memory_space<vmem>>, vector<1x16xf32>,
      %c0_100 = arith.constant 0 : index
      %c192_101 = arith.constant 192 : index
      %80 = vector.load %arg6[%c0_100, %c192_101] : memref<1x256xf32, #tpu.memory_space<vmem>>, vector<1x16xf32>
      %c15_102 = arith.constant 15 : index
      %c25_103 = arith.constant 25 : index
      %81 = vector.load %arg7[%c15_102, %c25_103] : memref<22x44xf32, #tpu.memory_space<vmem>>, vector<1x16xf32>
      tpu.vector_store %arg7[%c15_102, %c25_103], %80 {strides = array<i32>} : memref<22x44xf32, #tpu.memory_space<vmem>>, vector<1x16xf32>,
      %c0_104 = arith.constant 0 : index
      %c208 = arith.constant 208 : index
      %82 = vector.load %arg5[%c0_104, %c208] : memref<1x256xf32, #tpu.memory_space<vmem>>, vector<1x16xf32>
      %c16_105 = arith.constant 16 : index
      %c3_106 = arith.constant 3 : index
      %83 = vector.load %arg7[%c16_105, %c3_106] : memref<22x44xf32, #tpu.memory_space<vmem>>, vector<1x16xf32>
      tpu.vector_store %arg7[%c16_105, %c3_106], %82 {strides = array<i32>} : memref<22x44xf32, #tpu.memory_space<vmem>>, vector<1x16xf32>,
      %c0_107 = arith.constant 0 : index
      %c208_108 = arith.constant 208 : index
      %84 = vector.load %arg6[%c0_107, %c208_108] : memref<1x256xf32, #tpu.memory_space<vmem>>, vector<1x16xf32>
      %c16_109 = arith.constant 16 : index
      %c25_110 = arith.constant 25 : index
      %85 = vector.load %arg7[%c16_109, %c25_110] : memref<22x44xf32, #tpu.memory_space<vmem>>, vector<1x16xf32>
      tpu.vector_store %arg7[%c16_109, %c25_110], %84 {strides = array<i32>} : memref<22x44xf32, #tpu.memory_space<vmem>>, vector<1x16xf32>,
      %c0_111 = arith.constant 0 : index
      %c224 = arith.constant 224 : index
      %86 = vector.load %arg5[%c0_111, %c224] : memref<1x256xf32, #tpu.memory_space<vmem>>, vector<1x16xf32>
      %c17 = arith.constant 17 : index
      %c3_112 = arith.constant 3 : index
      %87 = vector.load %arg7[%c17, %c3_112] : memref<22x44xf32, #tpu.memory_space<vmem>>, vector<1x16xf32>
      tpu.vector_store %arg7[%c17, %c3_112], %86 {strides = array<i32>} : memref<22x44xf32, #tpu.memory_space<vmem>>, vector<1x16xf32>,
      %c0_113 = arith.constant 0 : index
      %c224_114 = arith.constant 224 : index
      %88 = vector.load %arg6[%c0_113, %c224_114] : memref<1x256xf32, #tpu.memory_space<vmem>>, vector<1x16xf32>
      %c17_115 = arith.constant 17 : index
      %c25_116 = arith.constant 25 : index
      %89 = vector.load %arg7[%c17_115, %c25_116] : memref<22x44xf32, #tpu.memory_space<vmem>>, vector<1x16xf32>
      tpu.vector_store %arg7[%c17_115, %c25_116], %88 {strides = array<i32>} : memref<22x44xf32, #tpu.memory_space<vmem>>, vector<1x16xf32>,
      %c0_117 = arith.constant 0 : index
      %c240 = arith.constant 240 : index
      %90 = vector.load %arg5[%c0_117, %c240] : memref<1x256xf32, #tpu.memory_space<vmem>>, vector<1x16xf32>
      %c18 = arith.constant 18 : index
      %c3_118 = arith.constant 3 : index
      %91 = vector.load %arg7[%c18, %c3_118] : memref<22x44xf32, #tpu.memory_space<vmem>>, vector<1x16xf32>
      tpu.vector_store %arg7[%c18, %c3_118], %90 {strides = array<i32>} : memref<22x44xf32, #tpu.memory_space<vmem>>, vector<1x16xf32>,
      %c0_119 = arith.constant 0 : index
      %c240_120 = arith.constant 240 : index
      %92 = vector.load %arg6[%c0_119, %c240_120] : memref<1x256xf32, #tpu.memory_space<vmem>>, vector<1x16xf32>
      %c18_121 = arith.constant 18 : index
      %c25_122 = arith.constant 25 : index
      %93 = vector.load %arg7[%c18_121, %c25_122] : memref<22x44xf32, #tpu.memory_space<vmem>>, vector<1x16xf32>
      tpu.vector_store %arg7[%c18_121, %c25_122], %92 {strides = array<i32>} : memref<22x44xf32, #tpu.memory_space<vmem>>, vector<1x16xf32>,
      %c0_123 = arith.constant 0 : index
      %94 = memref.load %arg2[%c0_123] : memref<98xf32, #tpu.memory_space<smem>>
      %c1 = arith.constant 1 : index
      %95 = memref.load %arg2[%c1] : memref<98xf32, #tpu.memory_space<smem>>
      %c2 = arith.constant 2 : index
      %96 = memref.load %arg2[%c2] : memref<98xf32, #tpu.memory_space<smem>>
      %c3_124 = arith.constant 3 : index
      %97 = memref.load %arg2[%c3_124] : memref<98xf32, #tpu.memory_space<smem>>
      %c4_125 = arith.constant 4 : index
      %98 = memref.load %arg2[%c4_125] : memref<98xf32, #tpu.memory_space<smem>>
      %c5_126 = arith.constant 5 : index
      %99 = memref.load %arg2[%c5_126] : memref<98xf32, #tpu.memory_space<smem>>
      %c6_127 = arith.constant 6 : index
      %100 = memref.load %arg2[%c6_127] : memref<98xf32, #tpu.memory_space<smem>>
      %c7_128 = arith.constant 7 : index
      %101 = memref.load %arg2[%c7_128] : memref<98xf32, #tpu.memory_space<smem>>
      %c8_129 = arith.constant 8 : index
      %102 = memref.load %arg2[%c8_129] : memref<98xf32, #tpu.memory_space<smem>>
      %c9_130 = arith.constant 9 : index
      %103 = memref.load %arg2[%c9_130] : memref<98xf32, #tpu.memory_space<smem>>
      %c10_131 = arith.constant 10 : index
      %104 = memref.load %arg2[%c10_131] : memref<98xf32, #tpu.memory_space<smem>>
      %c11_132 = arith.constant 11 : index
      %105 = memref.load %arg2[%c11_132] : memref<98xf32, #tpu.memory_space<smem>>
      %c12_133 = arith.constant 12 : index
      %106 = memref.load %arg2[%c12_133] : memref<98xf32, #tpu.memory_space<smem>>
      %c13_134 = arith.constant 13 : index
      %107 = memref.load %arg2[%c13_134] : memref<98xf32, #tpu.memory_space<smem>>
      %c14_135 = arith.constant 14 : index
      %108 = memref.load %arg2[%c14_135] : memref<98xf32, #tpu.memory_space<smem>>
      %c15_136 = arith.constant 15 : index
      %109 = memref.load %arg2[%c15_136] : memref<98xf32, #tpu.memory_space<smem>>
      %c16_137 = arith.constant 16 : index
      %110 = memref.load %arg2[%c16_137] : memref<98xf32, #tpu.memory_space<smem>>
      %c17_138 = arith.constant 17 : index
      %111 = memref.load %arg2[%c17_138] : memref<98xf32, #tpu.memory_space<smem>>
      %c18_139 = arith.constant 18 : index
      %112 = memref.load %arg2[%c18_139] : memref<98xf32, #tpu.memory_space<smem>>
      %c19 = arith.constant 19 : index
      %113 = memref.load %arg2[%c19] : memref<98xf32, #tpu.memory_space<smem>>
      %c20 = arith.constant 20 : index
      %114 = memref.load %arg2[%c20] : memref<98xf32, #tpu.memory_space<smem>>
      %c21 = arith.constant 21 : index
      %115 = memref.load %arg2[%c21] : memref<98xf32, #tpu.memory_space<smem>>
      %c22 = arith.constant 22 : index
      %116 = memref.load %arg2[%c22] : memref<98xf32, #tpu.memory_space<smem>>
      %c23 = arith.constant 23 : index
      %117 = memref.load %arg2[%c23] : memref<98xf32, #tpu.memory_space<smem>>
      %c24 = arith.constant 24 : index
      %118 = memref.load %arg2[%c24] : memref<98xf32, #tpu.memory_space<smem>>
      %c25_140 = arith.constant 25 : index
      %119 = memref.load %arg2[%c25_140] : memref<98xf32, #tpu.memory_space<smem>>
      %c26 = arith.constant 26 : index
      %120 = memref.load %arg2[%c26] : memref<98xf32, #tpu.memory_space<smem>>
      %c27 = arith.constant 27 : index
      %121 = memref.load %arg2[%c27] : memref<98xf32, #tpu.memory_space<smem>>
      %c28 = arith.constant 28 : index
      %122 = memref.load %arg2[%c28] : memref<98xf32, #tpu.memory_space<smem>>
      %c29 = arith.constant 29 : index
      %123 = memref.load %arg2[%c29] : memref<98xf32, #tpu.memory_space<smem>>
      %c30 = arith.constant 30 : index
      %124 = memref.load %arg2[%c30] : memref<98xf32, #tpu.memory_space<smem>>
      %c31 = arith.constant 31 : index
      %125 = memref.load %arg2[%c31] : memref<98xf32, #tpu.memory_space<smem>>
      %c32_141 = arith.constant 32 : index
      %126 = memref.load %arg2[%c32_141] : memref<98xf32, #tpu.memory_space<smem>>
      %c33 = arith.constant 33 : index
      %127 = memref.load %arg2[%c33] : memref<98xf32, #tpu.memory_space<smem>>
      %c34 = arith.constant 34 : index
      %128 = memref.load %arg2[%c34] : memref<98xf32, #tpu.memory_space<smem>>
      %c35 = arith.constant 35 : index
      %129 = memref.load %arg2[%c35] : memref<98xf32, #tpu.memory_space<smem>>
      %c36 = arith.constant 36 : index
      %130 = memref.load %arg2[%c36] : memref<98xf32, #tpu.memory_space<smem>>
      %c37 = arith.constant 37 : index
      %131 = memref.load %arg2[%c37] : memref<98xf32, #tpu.memory_space<smem>>
      %c38 = arith.constant 38 : index
      %132 = memref.load %arg2[%c38] : memref<98xf32, #tpu.memory_space<smem>>
      %c39 = arith.constant 39 : index
      %133 = memref.load %arg2[%c39] : memref<98xf32, #tpu.memory_space<smem>>
      %c40 = arith.constant 40 : index
      %134 = memref.load %arg2[%c40] : memref<98xf32, #tpu.memory_space<smem>>
      %c41 = arith.constant 41 : index
      %135 = memref.load %arg2[%c41] : memref<98xf32, #tpu.memory_space<smem>>
      %c42 = arith.constant 42 : index
      %136 = memref.load %arg2[%c42] : memref<98xf32, #tpu.memory_space<smem>>
      %c43 = arith.constant 43 : index
      %137 = memref.load %arg2[%c43] : memref<98xf32, #tpu.memory_space<smem>>
      %c44 = arith.constant 44 : index
      %138 = memref.load %arg2[%c44] : memref<98xf32, #tpu.memory_space<smem>>
      %c45 = arith.constant 45 : index
      %139 = memref.load %arg2[%c45] : memref<98xf32, #tpu.memory_space<smem>>
      %c46 = arith.constant 46 : index
      %140 = memref.load %arg2[%c46] : memref<98xf32, #tpu.memory_space<smem>>
      %c47 = arith.constant 47 : index
      %141 = memref.load %arg2[%c47] : memref<98xf32, #tpu.memory_space<smem>>
      %c48_142 = arith.constant 48 : index
      %142 = memref.load %arg2[%c48_142] : memref<98xf32, #tpu.memory_space<smem>>
      %c49 = arith.constant 49 : index
      %143 = memref.load %arg2[%c49] : memref<98xf32, #tpu.memory_space<smem>>
      %c50 = arith.constant 50 : index
      %144 = memref.load %arg2[%c50] : memref<98xf32, #tpu.memory_space<smem>>
      %c51 = arith.constant 51 : index
      %145 = memref.load %arg2[%c51] : memref<98xf32, #tpu.memory_space<smem>>
      %c52 = arith.constant 52 : index
      %146 = memref.load %arg2[%c52] : memref<98xf32, #tpu.memory_space<smem>>
      %c53 = arith.constant 53 : index
      %147 = memref.load %arg2[%c53] : memref<98xf32, #tpu.memory_space<smem>>
      %c54 = arith.constant 54 : index
      %148 = memref.load %arg2[%c54] : memref<98xf32, #tpu.memory_space<smem>>
      %c55 = arith.constant 55 : index
      %149 = memref.load %arg2[%c55] : memref<98xf32, #tpu.memory_space<smem>>
      %c56 = arith.constant 56 : index
      %150 = memref.load %arg2[%c56] : memref<98xf32, #tpu.memory_space<smem>>
      %c57 = arith.constant 57 : index
      %151 = memref.load %arg2[%c57] : memref<98xf32, #tpu.memory_space<smem>>
      %c58 = arith.constant 58 : index
      %152 = memref.load %arg2[%c58] : memref<98xf32, #tpu.memory_space<smem>>
      %c59 = arith.constant 59 : index
      %153 = memref.load %arg2[%c59] : memref<98xf32, #tpu.memory_space<smem>>
      %c60 = arith.constant 60 : index
      %154 = memref.load %arg2[%c60] : memref<98xf32, #tpu.memory_space<smem>>
      %c61 = arith.constant 61 : index
      %155 = memref.load %arg2[%c61] : memref<98xf32, #tpu.memory_space<smem>>
      %c62 = arith.constant 62 : index
      %156 = memref.load %arg2[%c62] : memref<98xf32, #tpu.memory_space<smem>>
      %c63 = arith.constant 63 : index
      %157 = memref.load %arg2[%c63] : memref<98xf32, #tpu.memory_space<smem>>
      %c64_143 = arith.constant 64 : index
      %158 = memref.load %arg2[%c64_143] : memref<98xf32, #tpu.memory_space<smem>>
      %c65 = arith.constant 65 : index
      %159 = memref.load %arg2[%c65] : memref<98xf32, #tpu.memory_space<smem>>
      %c66 = arith.constant 66 : index
      %160 = memref.load %arg2[%c66] : memref<98xf32, #tpu.memory_space<smem>>
      %c67 = arith.constant 67 : index
      %161 = memref.load %arg2[%c67] : memref<98xf32, #tpu.memory_space<smem>>
      %c68 = arith.constant 68 : index
      %162 = memref.load %arg2[%c68] : memref<98xf32, #tpu.memory_space<smem>>
      %c69 = arith.constant 69 : index
      %163 = memref.load %arg2[%c69] : memref<98xf32, #tpu.memory_space<smem>>
      %c70 = arith.constant 70 : index
      %164 = memref.load %arg2[%c70] : memref<98xf32, #tpu.memory_space<smem>>
      %c71 = arith.constant 71 : index
      %165 = memref.load %arg2[%c71] : memref<98xf32, #tpu.memory_space<smem>>
      %c72 = arith.constant 72 : index
      %166 = memref.load %arg2[%c72] : memref<98xf32, #tpu.memory_space<smem>>
      %c73 = arith.constant 73 : index
      %167 = memref.load %arg2[%c73] : memref<98xf32, #tpu.memory_space<smem>>
      %c74 = arith.constant 74 : index
      %168 = memref.load %arg2[%c74] : memref<98xf32, #tpu.memory_space<smem>>
      %c75 = arith.constant 75 : index
      %169 = memref.load %arg2[%c75] : memref<98xf32, #tpu.memory_space<smem>>
      %c76 = arith.constant 76 : index
      %170 = memref.load %arg2[%c76] : memref<98xf32, #tpu.memory_space<smem>>
      %c77 = arith.constant 77 : index
      %171 = memref.load %arg2[%c77] : memref<98xf32, #tpu.memory_space<smem>>
      %c78 = arith.constant 78 : index
      %172 = memref.load %arg2[%c78] : memref<98xf32, #tpu.memory_space<smem>>
      %c79 = arith.constant 79 : index
      %173 = memref.load %arg2[%c79] : memref<98xf32, #tpu.memory_space<smem>>
      %c80_144 = arith.constant 80 : index
      %174 = memref.load %arg2[%c80_144] : memref<98xf32, #tpu.memory_space<smem>>
      %c81 = arith.constant 81 : index
      %175 = memref.load %arg2[%c81] : memref<98xf32, #tpu.memory_space<smem>>
      %c82 = arith.constant 82 : index
      %176 = memref.load %arg2[%c82] : memref<98xf32, #tpu.memory_space<smem>>
      %c83 = arith.constant 83 : index
      %177 = memref.load %arg2[%c83] : memref<98xf32, #tpu.memory_space<smem>>
      %c84 = arith.constant 84 : index
      %178 = memref.load %arg2[%c84] : memref<98xf32, #tpu.memory_space<smem>>
      %c85 = arith.constant 85 : index
      %179 = memref.load %arg2[%c85] : memref<98xf32, #tpu.memory_space<smem>>
      %c86 = arith.constant 86 : index
      %180 = memref.load %arg2[%c86] : memref<98xf32, #tpu.memory_space<smem>>
      %c87 = arith.constant 87 : index
      %181 = memref.load %arg2[%c87] : memref<98xf32, #tpu.memory_space<smem>>
      %c88 = arith.constant 88 : index
      %182 = memref.load %arg2[%c88] : memref<98xf32, #tpu.memory_space<smem>>
      %c89 = arith.constant 89 : index
      %183 = memref.load %arg2[%c89] : memref<98xf32, #tpu.memory_space<smem>>
      %c90 = arith.constant 90 : index
      %184 = memref.load %arg2[%c90] : memref<98xf32, #tpu.memory_space<smem>>
      %c91 = arith.constant 91 : index
      %185 = memref.load %arg2[%c91] : memref<98xf32, #tpu.memory_space<smem>>
      %c92 = arith.constant 92 : index
      %186 = memref.load %arg2[%c92] : memref<98xf32, #tpu.memory_space<smem>>
      %c93 = arith.constant 93 : index
      %187 = memref.load %arg2[%c93] : memref<98xf32, #tpu.memory_space<smem>>
      %c94 = arith.constant 94 : index
      %188 = memref.load %arg2[%c94] : memref<98xf32, #tpu.memory_space<smem>>
      %c95 = arith.constant 95 : index
      %189 = memref.load %arg2[%c95] : memref<98xf32, #tpu.memory_space<smem>>
      %c96_145 = arith.constant 96 : index
      %190 = memref.load %arg2[%c96_145] : memref<98xf32, #tpu.memory_space<smem>>
      %c97 = arith.constant 97 : index
      %191 = memref.load %arg2[%c97] : memref<98xf32, #tpu.memory_space<smem>>
      %192 = tpu.iota {dimensions = array<i32: 0>} : vector<44x16xi32>
      %193 = tpu.iota {dimensions = array<i32: 1>} : vector<44x16xi32>
      %194 = arith.subi %192, %193 : vector<44x16xi32>
      %c22_i32 = arith.constant 22 : i32
      %195 = vector.broadcast %c22_i32 : i32 to vector<44x16xi32>
      %196 = arith.subi %194, %195 : vector<44x16xi32>
      %cst_146 = arith.constant 0.000000e+00 : f32
      %197 = vector.broadcast %cst_146 : f32 to vector<16x16xf32>
      %c0_147 = arith.constant 0 : index
      %c0_148 = arith.constant 0 : index
      %198 = vector.load %arg7[%c0_147, %c0_148] : memref<22x44xf32, #tpu.memory_space<vmem>>, vector<16x44xf32>
      %cst_149 = arith.constant 0.000000e+00 : f32
      %199 = vector.broadcast %cst_149 : f32 to vector<44x16xf32>
      %c0_i32_150 = arith.constant 0 : i32
      %200 = vector.broadcast %c0_i32_150 : i32 to vector<44x16xi32>
      %201 = arith.cmpi eq, %194, %200 : vector<44x16xi32>
      %202 = vector.broadcast %94 : f32 to vector<44x16xf32>
      %203 = arith.select %201, %202, %199 : vector<44x16xi1>, vector<44x16xf32>
      %c0_i32_151 = arith.constant 0 : i32
      %204 = vector.broadcast %c0_i32_151 : i32 to vector<44x16xi32>
      %205 = arith.cmpi eq, %196, %204 : vector<44x16xi32>
      %206 = vector.broadcast %143 : f32 to vector<44x16xf32>
      %207 = arith.select %205, %206, %203 : vector<44x16xi1>, vector<44x16xf32>
      %c1_i32 = arith.constant 1 : i32
      %208 = vector.broadcast %c1_i32 : i32 to vector<44x16xi32>
      %209 = arith.cmpi eq, %194, %208 : vector<44x16xi32>
      %210 = vector.broadcast %95 : f32 to vector<44x16xf32>
      %211 = arith.select %209, %210, %207 : vector<44x16xi1>, vector<44x16xf32>
      %c1_i32_152 = arith.constant 1 : i32
      %212 = vector.broadcast %c1_i32_152 : i32 to vector<44x16xi32>
      %213 = arith.cmpi eq, %196, %212 : vector<44x16xi32>
      %214 = vector.broadcast %144 : f32 to vector<44x16xf32>
      %215 = arith.select %213, %214, %211 : vector<44x16xi1>, vector<44x16xf32>
      %c2_i32 = arith.constant 2 : i32
      %216 = vector.broadcast %c2_i32 : i32 to vector<44x16xi32>
      %217 = arith.cmpi eq, %194, %216 : vector<44x16xi32>
      %218 = vector.broadcast %96 : f32 to vector<44x16xf32>
      %219 = arith.select %217, %218, %215 : vector<44x16xi1>, vector<44x16xf32>
      %c2_i32_153 = arith.constant 2 : i32
      %220 = vector.broadcast %c2_i32_153 : i32 to vector<44x16xi32>
      %221 = arith.cmpi eq, %196, %220 : vector<44x16xi32>
      %222 = vector.broadcast %145 : f32 to vector<44x16xf32>
      %223 = arith.select %221, %222, %219 : vector<44x16xi1>, vector<44x16xf32>
      %c3_i32_154 = arith.constant 3 : i32
      %224 = vector.broadcast %c3_i32_154 : i32 to vector<44x16xi32>
      %225 = arith.cmpi eq, %194, %224 : vector<44x16xi32>
      %226 = vector.broadcast %97 : f32 to vector<44x16xf32>
      %227 = arith.select %225, %226, %223 : vector<44x16xi1>, vector<44x16xf32>
      %c3_i32_155 = arith.constant 3 : i32
      %228 = vector.broadcast %c3_i32_155 : i32 to vector<44x16xi32>
      %229 = arith.cmpi eq, %196, %228 : vector<44x16xi32>
      %230 = vector.broadcast %146 : f32 to vector<44x16xf32>
      %231 = arith.select %229, %230, %227 : vector<44x16xi1>, vector<44x16xf32>
      %c4_i32 = arith.constant 4 : i32
      %232 = vector.broadcast %c4_i32 : i32 to vector<44x16xi32>
      %233 = arith.cmpi eq, %194, %232 : vector<44x16xi32>
      %234 = vector.broadcast %98 : f32 to vector<44x16xf32>
      %235 = arith.select %233, %234, %231 : vector<44x16xi1>, vector<44x16xf32>
      %c4_i32_156 = arith.constant 4 : i32
      %236 = vector.broadcast %c4_i32_156 : i32 to vector<44x16xi32>
      %237 = arith.cmpi eq, %196, %236 : vector<44x16xi32>
      %238 = vector.broadcast %147 : f32 to vector<44x16xf32>
      %239 = arith.select %237, %238, %235 : vector<44x16xi1>, vector<44x16xf32>
      %c5_i32 = arith.constant 5 : i32
      %240 = vector.broadcast %c5_i32 : i32 to vector<44x16xi32>
      %241 = arith.cmpi eq, %194, %240 : vector<44x16xi32>
      %242 = vector.broadcast %99 : f32 to vector<44x16xf32>
      %243 = arith.select %241, %242, %239 : vector<44x16xi1>, vector<44x16xf32>
      %c5_i32_157 = arith.constant 5 : i32
      %244 = vector.broadcast %c5_i32_157 : i32 to vector<44x16xi32>
      %245 = arith.cmpi eq, %196, %244 : vector<44x16xi32>
      %246 = vector.broadcast %148 : f32 to vector<44x16xf32>
      %247 = arith.select %245, %246, %243 : vector<44x16xi1>, vector<44x16xf32>
      %c6_i32 = arith.constant 6 : i32
      %248 = vector.broadcast %c6_i32 : i32 to vector<44x16xi32>
      %249 = arith.cmpi eq, %194, %248 : vector<44x16xi32>
      %250 = vector.broadcast %100 : f32 to vector<44x16xf32>
      %251 = arith.select %249, %250, %247 : vector<44x16xi1>, vector<44x16xf32>
      %c6_i32_158 = arith.constant 6 : i32
      %252 = vector.broadcast %c6_i32_158 : i32 to vector<44x16xi32>
      %253 = arith.cmpi eq, %196, %252 : vector<44x16xi32>
      %254 = vector.broadcast %149 : f32 to vector<44x16xf32>
      %255 = arith.select %253, %254, %251 : vector<44x16xi1>, vector<44x16xf32>
      %cst_159 = arith.constant dense<0.000000e+00> : vector<16x16xf32>
      %256 = tpu.matmul %198, %255, %cst_159 {dimension_numbers = #tpu.dot_dimension_numbers<[1], [0], [0], [1], [0, 0, 1, 1], [], []>} : vector<16x44xf32>, vector<44x16xf32>, vector<16x16xf32> -> vector<16x16xf32>
      %257 = arith.addf %197, %256 : vector<16x16xf32>
      %c1_160 = arith.constant 1 : index
      %c0_161 = arith.constant 0 : index
      %258 = vector.load %arg7[%c1_160, %c0_161] : memref<22x44xf32, #tpu.memory_space<vmem>>, vector<16x44xf32>
      %cst_162 = arith.constant 0.000000e+00 : f32
      %259 = vector.broadcast %cst_162 : f32 to vector<44x16xf32>
      %c0_i32_163 = arith.constant 0 : i32
      %260 = vector.broadcast %c0_i32_163 : i32 to vector<44x16xi32>
      %261 = arith.cmpi eq, %194, %260 : vector<44x16xi32>
      %262 = vector.broadcast %101 : f32 to vector<44x16xf32>
      %263 = arith.select %261, %262, %259 : vector<44x16xi1>, vector<44x16xf32>
      %c0_i32_164 = arith.constant 0 : i32
      %264 = vector.broadcast %c0_i32_164 : i32 to vector<44x16xi32>
      %265 = arith.cmpi eq, %196, %264 : vector<44x16xi32>
      %266 = vector.broadcast %150 : f32 to vector<44x16xf32>
      %267 = arith.select %265, %266, %263 : vector<44x16xi1>, vector<44x16xf32>
      %c1_i32_165 = arith.constant 1 : i32
      %268 = vector.broadcast %c1_i32_165 : i32 to vector<44x16xi32>
      %269 = arith.cmpi eq, %194, %268 : vector<44x16xi32>
      %270 = vector.broadcast %102 : f32 to vector<44x16xf32>
      %271 = arith.select %269, %270, %267 : vector<44x16xi1>, vector<44x16xf32>
      %c1_i32_166 = arith.constant 1 : i32
      %272 = vector.broadcast %c1_i32_166 : i32 to vector<44x16xi32>
      %273 = arith.cmpi eq, %196, %272 : vector<44x16xi32>
      %274 = vector.broadcast %151 : f32 to vector<44x16xf32>
      %275 = arith.select %273, %274, %271 : vector<44x16xi1>, vector<44x16xf32>
      %c2_i32_167 = arith.constant 2 : i32
      %276 = vector.broadcast %c2_i32_167 : i32 to vector<44x16xi32>
      %277 = arith.cmpi eq, %194, %276 : vector<44x16xi32>
      %278 = vector.broadcast %103 : f32 to vector<44x16xf32>
      %279 = arith.select %277, %278, %275 : vector<44x16xi1>, vector<44x16xf32>
      %c2_i32_168 = arith.constant 2 : i32
      %280 = vector.broadcast %c2_i32_168 : i32 to vector<44x16xi32>
      %281 = arith.cmpi eq, %196, %280 : vector<44x16xi32>
      %282 = vector.broadcast %152 : f32 to vector<44x16xf32>
      %283 = arith.select %281, %282, %279 : vector<44x16xi1>, vector<44x16xf32>
      %c3_i32_169 = arith.constant 3 : i32
      %284 = vector.broadcast %c3_i32_169 : i32 to vector<44x16xi32>
      %285 = arith.cmpi eq, %194, %284 : vector<44x16xi32>
      %286 = vector.broadcast %104 : f32 to vector<44x16xf32>
      %287 = arith.select %285, %286, %283 : vector<44x16xi1>, vector<44x16xf32>
      %c3_i32_170 = arith.constant 3 : i32
      %288 = vector.broadcast %c3_i32_170 : i32 to vector<44x16xi32>
      %289 = arith.cmpi eq, %196, %288 : vector<44x16xi32>
      %290 = vector.broadcast %153 : f32 to vector<44x16xf32>
      %291 = arith.select %289, %290, %287 : vector<44x16xi1>, vector<44x16xf32>
      %c4_i32_171 = arith.constant 4 : i32
      %292 = vector.broadcast %c4_i32_171 : i32 to vector<44x16xi32>
      %293 = arith.cmpi eq, %194, %292 : vector<44x16xi32>
      %294 = vector.broadcast %105 : f32 to vector<44x16xf32>
      %295 = arith.select %293, %294, %291 : vector<44x16xi1>, vector<44x16xf32>
      %c4_i32_172 = arith.constant 4 : i32
      %296 = vector.broadcast %c4_i32_172 : i32 to vector<44x16xi32>
      %297 = arith.cmpi eq, %196, %296 : vector<44x16xi32>
      %298 = vector.broadcast %154 : f32 to vector<44x16xf32>
      %299 = arith.select %297, %298, %295 : vector<44x16xi1>, vector<44x16xf32>
      %c5_i32_173 = arith.constant 5 : i32
      %300 = vector.broadcast %c5_i32_173 : i32 to vector<44x16xi32>
      %301 = arith.cmpi eq, %194, %300 : vector<44x16xi32>
      %302 = vector.broadcast %106 : f32 to vector<44x16xf32>
      %303 = arith.select %301, %302, %299 : vector<44x16xi1>, vector<44x16xf32>
      %c5_i32_174 = arith.constant 5 : i32
      %304 = vector.broadcast %c5_i32_174 : i32 to vector<44x16xi32>
      %305 = arith.cmpi eq, %196, %304 : vector<44x16xi32>
      %306 = vector.broadcast %155 : f32 to vector<44x16xf32>
      %307 = arith.select %305, %306, %303 : vector<44x16xi1>, vector<44x16xf32>
      %c6_i32_175 = arith.constant 6 : i32
      %308 = vector.broadcast %c6_i32_175 : i32 to vector<44x16xi32>
      %309 = arith.cmpi eq, %194, %308 : vector<44x16xi32>
      %310 = vector.broadcast %107 : f32 to vector<44x16xf32>
      %311 = arith.select %309, %310, %307 : vector<44x16xi1>, vector<44x16xf32>
      %c6_i32_176 = arith.constant 6 : i32
      %312 = vector.broadcast %c6_i32_176 : i32 to vector<44x16xi32>
      %313 = arith.cmpi eq, %196, %312 : vector<44x16xi32>
      %314 = vector.broadcast %156 : f32 to vector<44x16xf32>
      %315 = arith.select %313, %314, %311 : vector<44x16xi1>, vector<44x16xf32>
      %cst_177 = arith.constant dense<0.000000e+00> : vector<16x16xf32>
      %316 = tpu.matmul %258, %315, %cst_177 {dimension_numbers = #tpu.dot_dimension_numbers<[1], [0], [0], [1], [0, 0, 1, 1], [], []>} : vector<16x44xf32>, vector<44x16xf32>, vector<16x16xf32> -> vector<16x16xf32>
      %317 = arith.addf %257, %316 : vector<16x16xf32>
      %c2_178 = arith.constant 2 : index
      %c0_179 = arith.constant 0 : index
      %318 = vector.load %arg7[%c2_178, %c0_179] : memref<22x44xf32, #tpu.memory_space<vmem>>, vector<16x44xf32>
      %cst_180 = arith.constant 0.000000e+00 : f32
      %319 = vector.broadcast %cst_180 : f32 to vector<44x16xf32>
      %c0_i32_181 = arith.constant 0 : i32
      %320 = vector.broadcast %c0_i32_181 : i32 to vector<44x16xi32>
      %321 = arith.cmpi eq, %194, %320 : vector<44x16xi32>
      %322 = vector.broadcast %108 : f32 to vector<44x16xf32>
      %323 = arith.select %321, %322, %319 : vector<44x16xi1>, vector<44x16xf32>
      %c0_i32_182 = arith.constant 0 : i32
      %324 = vector.broadcast %c0_i32_182 : i32 to vector<44x16xi32>
      %325 = arith.cmpi eq, %196, %324 : vector<44x16xi32>
      %326 = vector.broadcast %157 : f32 to vector<44x16xf32>
      %327 = arith.select %325, %326, %323 : vector<44x16xi1>, vector<44x16xf32>
      %c1_i32_183 = arith.constant 1 : i32
      %328 = vector.broadcast %c1_i32_183 : i32 to vector<44x16xi32>
      %329 = arith.cmpi eq, %194, %328 : vector<44x16xi32>
      %330 = vector.broadcast %109 : f32 to vector<44x16xf32>
      %331 = arith.select %329, %330, %327 : vector<44x16xi1>, vector<44x16xf32>
      %c1_i32_184 = arith.constant 1 : i32
      %332 = vector.broadcast %c1_i32_184 : i32 to vector<44x16xi32>
      %333 = arith.cmpi eq, %196, %332 : vector<44x16xi32>
      %334 = vector.broadcast %158 : f32 to vector<44x16xf32>
      %335 = arith.select %333, %334, %331 : vector<44x16xi1>, vector<44x16xf32>
      %c2_i32_185 = arith.constant 2 : i32
      %336 = vector.broadcast %c2_i32_185 : i32 to vector<44x16xi32>
      %337 = arith.cmpi eq, %194, %336 : vector<44x16xi32>
      %338 = vector.broadcast %110 : f32 to vector<44x16xf32>
      %339 = arith.select %337, %338, %335 : vector<44x16xi1>, vector<44x16xf32>
      %c2_i32_186 = arith.constant 2 : i32
      %340 = vector.broadcast %c2_i32_186 : i32 to vector<44x16xi32>
      %341 = arith.cmpi eq, %196, %340 : vector<44x16xi32>
      %342 = vector.broadcast %159 : f32 to vector<44x16xf32>
      %343 = arith.select %341, %342, %339 : vector<44x16xi1>, vector<44x16xf32>
      %c3_i32_187 = arith.constant 3 : i32
      %344 = vector.broadcast %c3_i32_187 : i32 to vector<44x16xi32>
      %345 = arith.cmpi eq, %194, %344 : vector<44x16xi32>
      %346 = vector.broadcast %111 : f32 to vector<44x16xf32>
      %347 = arith.select %345, %346, %343 : vector<44x16xi1>, vector<44x16xf32>
      %c3_i32_188 = arith.constant 3 : i32
      %348 = vector.broadcast %c3_i32_188 : i32 to vector<44x16xi32>
      %349 = arith.cmpi eq, %196, %348 : vector<44x16xi32>
      %350 = vector.broadcast %160 : f32 to vector<44x16xf32>
      %351 = arith.select %349, %350, %347 : vector<44x16xi1>, vector<44x16xf32>
      %c4_i32_189 = arith.constant 4 : i32
      %352 = vector.broadcast %c4_i32_189 : i32 to vector<44x16xi32>
      %353 = arith.cmpi eq, %194, %352 : vector<44x16xi32>
      %354 = vector.broadcast %112 : f32 to vector<44x16xf32>
      %355 = arith.select %353, %354, %351 : vector<44x16xi1>, vector<44x16xf32>
      %c4_i32_190 = arith.constant 4 : i32
      %356 = vector.broadcast %c4_i32_190 : i32 to vector<44x16xi32>
      %357 = arith.cmpi eq, %196, %356 : vector<44x16xi32>
      %358 = vector.broadcast %161 : f32 to vector<44x16xf32>
      %359 = arith.select %357, %358, %355 : vector<44x16xi1>, vector<44x16xf32>
      %c5_i32_191 = arith.constant 5 : i32
      %360 = vector.broadcast %c5_i32_191 : i32 to vector<44x16xi32>
      %361 = arith.cmpi eq, %194, %360 : vector<44x16xi32>
      %362 = vector.broadcast %113 : f32 to vector<44x16xf32>
      %363 = arith.select %361, %362, %359 : vector<44x16xi1>, vector<44x16xf32>
      %c5_i32_192 = arith.constant 5 : i32
      %364 = vector.broadcast %c5_i32_192 : i32 to vector<44x16xi32>
      %365 = arith.cmpi eq, %196, %364 : vector<44x16xi32>
      %366 = vector.broadcast %162 : f32 to vector<44x16xf32>
      %367 = arith.select %365, %366, %363 : vector<44x16xi1>, vector<44x16xf32>
      %c6_i32_193 = arith.constant 6 : i32
      %368 = vector.broadcast %c6_i32_193 : i32 to vector<44x16xi32>
      %369 = arith.cmpi eq, %194, %368 : vector<44x16xi32>
      %370 = vector.broadcast %114 : f32 to vector<44x16xf32>
      %371 = arith.select %369, %370, %367 : vector<44x16xi1>, vector<44x16xf32>
      %c6_i32_194 = arith.constant 6 : i32
      %372 = vector.broadcast %c6_i32_194 : i32 to vector<44x16xi32>
      %373 = arith.cmpi eq, %196, %372 : vector<44x16xi32>
      %374 = vector.broadcast %163 : f32 to vector<44x16xf32>
      %375 = arith.select %373, %374, %371 : vector<44x16xi1>, vector<44x16xf32>
      %cst_195 = arith.constant dense<0.000000e+00> : vector<16x16xf32>
      %376 = tpu.matmul %318, %375, %cst_195 {dimension_numbers = #tpu.dot_dimension_numbers<[1], [0], [0], [1], [0, 0, 1, 1], [], []>} : vector<16x44xf32>, vector<44x16xf32>, vector<16x16xf32> -> vector<16x16xf32>
      %377 = arith.addf %317, %376 : vector<16x16xf32>
      %c3_196 = arith.constant 3 : index
      %c0_197 = arith.constant 0 : index
      %378 = vector.load %arg7[%c3_196, %c0_197] : memref<22x44xf32, #tpu.memory_space<vmem>>, vector<16x44xf32>
      %cst_198 = arith.constant 0.000000e+00 : f32
      %379 = vector.broadcast %cst_198 : f32 to vector<44x16xf32>
      %c0_i32_199 = arith.constant 0 : i32
      %380 = vector.broadcast %c0_i32_199 : i32 to vector<44x16xi32>
      %381 = arith.cmpi eq, %194, %380 : vector<44x16xi32>
      %382 = vector.broadcast %115 : f32 to vector<44x16xf32>
      %383 = arith.select %381, %382, %379 : vector<44x16xi1>, vector<44x16xf32>
      %c0_i32_200 = arith.constant 0 : i32
      %384 = vector.broadcast %c0_i32_200 : i32 to vector<44x16xi32>
      %385 = arith.cmpi eq, %196, %384 : vector<44x16xi32>
      %386 = vector.broadcast %164 : f32 to vector<44x16xf32>
      %387 = arith.select %385, %386, %383 : vector<44x16xi1>, vector<44x16xf32>
      %c1_i32_201 = arith.constant 1 : i32
      %388 = vector.broadcast %c1_i32_201 : i32 to vector<44x16xi32>
      %389 = arith.cmpi eq, %194, %388 : vector<44x16xi32>
      %390 = vector.broadcast %116 : f32 to vector<44x16xf32>
      %391 = arith.select %389, %390, %387 : vector<44x16xi1>, vector<44x16xf32>
      %c1_i32_202 = arith.constant 1 : i32
      %392 = vector.broadcast %c1_i32_202 : i32 to vector<44x16xi32>
      %393 = arith.cmpi eq, %196, %392 : vector<44x16xi32>
      %394 = vector.broadcast %165 : f32 to vector<44x16xf32>
      %395 = arith.select %393, %394, %391 : vector<44x16xi1>, vector<44x16xf32>
      %c2_i32_203 = arith.constant 2 : i32
      %396 = vector.broadcast %c2_i32_203 : i32 to vector<44x16xi32>
      %397 = arith.cmpi eq, %194, %396 : vector<44x16xi32>
      %398 = vector.broadcast %117 : f32 to vector<44x16xf32>
      %399 = arith.select %397, %398, %395 : vector<44x16xi1>, vector<44x16xf32>
      %c2_i32_204 = arith.constant 2 : i32
      %400 = vector.broadcast %c2_i32_204 : i32 to vector<44x16xi32>
      %401 = arith.cmpi eq, %196, %400 : vector<44x16xi32>
      %402 = vector.broadcast %166 : f32 to vector<44x16xf32>
      %403 = arith.select %401, %402, %399 : vector<44x16xi1>, vector<44x16xf32>
      %c3_i32_205 = arith.constant 3 : i32
      %404 = vector.broadcast %c3_i32_205 : i32 to vector<44x16xi32>
      %405 = arith.cmpi eq, %194, %404 : vector<44x16xi32>
      %406 = vector.broadcast %118 : f32 to vector<44x16xf32>
      %407 = arith.select %405, %406, %403 : vector<44x16xi1>, vector<44x16xf32>
      %c3_i32_206 = arith.constant 3 : i32
      %408 = vector.broadcast %c3_i32_206 : i32 to vector<44x16xi32>
      %409 = arith.cmpi eq, %196, %408 : vector<44x16xi32>
      %410 = vector.broadcast %167 : f32 to vector<44x16xf32>
      %411 = arith.select %409, %410, %407 : vector<44x16xi1>, vector<44x16xf32>
      %c4_i32_207 = arith.constant 4 : i32
      %412 = vector.broadcast %c4_i32_207 : i32 to vector<44x16xi32>
      %413 = arith.cmpi eq, %194, %412 : vector<44x16xi32>
      %414 = vector.broadcast %119 : f32 to vector<44x16xf32>
      %415 = arith.select %413, %414, %411 : vector<44x16xi1>, vector<44x16xf32>
      %c4_i32_208 = arith.constant 4 : i32
      %416 = vector.broadcast %c4_i32_208 : i32 to vector<44x16xi32>
      %417 = arith.cmpi eq, %196, %416 : vector<44x16xi32>
      %418 = vector.broadcast %168 : f32 to vector<44x16xf32>
      %419 = arith.select %417, %418, %415 : vector<44x16xi1>, vector<44x16xf32>
      %c5_i32_209 = arith.constant 5 : i32
      %420 = vector.broadcast %c5_i32_209 : i32 to vector<44x16xi32>
      %421 = arith.cmpi eq, %194, %420 : vector<44x16xi32>
      %422 = vector.broadcast %120 : f32 to vector<44x16xf32>
      %423 = arith.select %421, %422, %419 : vector<44x16xi1>, vector<44x16xf32>
      %c5_i32_210 = arith.constant 5 : i32
      %424 = vector.broadcast %c5_i32_210 : i32 to vector<44x16xi32>
      %425 = arith.cmpi eq, %196, %424 : vector<44x16xi32>
      %426 = vector.broadcast %169 : f32 to vector<44x16xf32>
      %427 = arith.select %425, %426, %423 : vector<44x16xi1>, vector<44x16xf32>
      %c6_i32_211 = arith.constant 6 : i32
      %428 = vector.broadcast %c6_i32_211 : i32 to vector<44x16xi32>
      %429 = arith.cmpi eq, %194, %428 : vector<44x16xi32>
      %430 = vector.broadcast %121 : f32 to vector<44x16xf32>
      %431 = arith.select %429, %430, %427 : vector<44x16xi1>, vector<44x16xf32>
      %c6_i32_212 = arith.constant 6 : i32
      %432 = vector.broadcast %c6_i32_212 : i32 to vector<44x16xi32>
      %433 = arith.cmpi eq, %196, %432 : vector<44x16xi32>
      %434 = vector.broadcast %170 : f32 to vector<44x16xf32>
      %435 = arith.select %433, %434, %431 : vector<44x16xi1>, vector<44x16xf32>
      %cst_213 = arith.constant dense<0.000000e+00> : vector<16x16xf32>
      %436 = tpu.matmul %378, %435, %cst_213 {dimension_numbers = #tpu.dot_dimension_numbers<[1], [0], [0], [1], [0, 0, 1, 1], [], []>} : vector<16x44xf32>, vector<44x16xf32>, vector<16x16xf32> -> vector<16x16xf32>
      %437 = arith.addf %377, %436 : vector<16x16xf32>
      %c4_214 = arith.constant 4 : index
      %c0_215 = arith.constant 0 : index
      %438 = vector.load %arg7[%c4_214, %c0_215] : memref<22x44xf32, #tpu.memory_space<vmem>>, vector<16x44xf32>
      %cst_216 = arith.constant 0.000000e+00 : f32
      %439 = vector.broadcast %cst_216 : f32 to vector<44x16xf32>
      %c0_i32_217 = arith.constant 0 : i32
      %440 = vector.broadcast %c0_i32_217 : i32 to vector<44x16xi32>
      %441 = arith.cmpi eq, %194, %440 : vector<44x16xi32>
      %442 = vector.broadcast %122 : f32 to vector<44x16xf32>
      %443 = arith.select %441, %442, %439 : vector<44x16xi1>, vector<44x16xf32>
      %c0_i32_218 = arith.constant 0 : i32
      %444 = vector.broadcast %c0_i32_218 : i32 to vector<44x16xi32>
      %445 = arith.cmpi eq, %196, %444 : vector<44x16xi32>
      %446 = vector.broadcast %171 : f32 to vector<44x16xf32>
      %447 = arith.select %445, %446, %443 : vector<44x16xi1>, vector<44x16xf32>
      %c1_i32_219 = arith.constant 1 : i32
      %448 = vector.broadcast %c1_i32_219 : i32 to vector<44x16xi32>
      %449 = arith.cmpi eq, %194, %448 : vector<44x16xi32>
      %450 = vector.broadcast %123 : f32 to vector<44x16xf32>
      %451 = arith.select %449, %450, %447 : vector<44x16xi1>, vector<44x16xf32>
      %c1_i32_220 = arith.constant 1 : i32
      %452 = vector.broadcast %c1_i32_220 : i32 to vector<44x16xi32>
      %453 = arith.cmpi eq, %196, %452 : vector<44x16xi32>
      %454 = vector.broadcast %172 : f32 to vector<44x16xf32>
      %455 = arith.select %453, %454, %451 : vector<44x16xi1>, vector<44x16xf32>
      %c2_i32_221 = arith.constant 2 : i32
      %456 = vector.broadcast %c2_i32_221 : i32 to vector<44x16xi32>
      %457 = arith.cmpi eq, %194, %456 : vector<44x16xi32>
      %458 = vector.broadcast %124 : f32 to vector<44x16xf32>
      %459 = arith.select %457, %458, %455 : vector<44x16xi1>, vector<44x16xf32>
      %c2_i32_222 = arith.constant 2 : i32
      %460 = vector.broadcast %c2_i32_222 : i32 to vector<44x16xi32>
      %461 = arith.cmpi eq, %196, %460 : vector<44x16xi32>
      %462 = vector.broadcast %173 : f32 to vector<44x16xf32>
      %463 = arith.select %461, %462, %459 : vector<44x16xi1>, vector<44x16xf32>
      %c3_i32_223 = arith.constant 3 : i32
      %464 = vector.broadcast %c3_i32_223 : i32 to vector<44x16xi32>
      %465 = arith.cmpi eq, %194, %464 : vector<44x16xi32>
      %466 = vector.broadcast %125 : f32 to vector<44x16xf32>
      %467 = arith.select %465, %466, %463 : vector<44x16xi1>, vector<44x16xf32>
      %c3_i32_224 = arith.constant 3 : i32
      %468 = vector.broadcast %c3_i32_224 : i32 to vector<44x16xi32>
      %469 = arith.cmpi eq, %196, %468 : vector<44x16xi32>
      %470 = vector.broadcast %174 : f32 to vector<44x16xf32>
      %471 = arith.select %469, %470, %467 : vector<44x16xi1>, vector<44x16xf32>
      %c4_i32_225 = arith.constant 4 : i32
      %472 = vector.broadcast %c4_i32_225 : i32 to vector<44x16xi32>
      %473 = arith.cmpi eq, %194, %472 : vector<44x16xi32>
      %474 = vector.broadcast %126 : f32 to vector<44x16xf32>
      %475 = arith.select %473, %474, %471 : vector<44x16xi1>, vector<44x16xf32>
      %c4_i32_226 = arith.constant 4 : i32
      %476 = vector.broadcast %c4_i32_226 : i32 to vector<44x16xi32>
      %477 = arith.cmpi eq, %196, %476 : vector<44x16xi32>
      %478 = vector.broadcast %175 : f32 to vector<44x16xf32>
      %479 = arith.select %477, %478, %475 : vector<44x16xi1>, vector<44x16xf32>
      %c5_i32_227 = arith.constant 5 : i32
      %480 = vector.broadcast %c5_i32_227 : i32 to vector<44x16xi32>
      %481 = arith.cmpi eq, %194, %480 : vector<44x16xi32>
      %482 = vector.broadcast %127 : f32 to vector<44x16xf32>
      %483 = arith.select %481, %482, %479 : vector<44x16xi1>, vector<44x16xf32>
      %c5_i32_228 = arith.constant 5 : i32
      %484 = vector.broadcast %c5_i32_228 : i32 to vector<44x16xi32>
      %485 = arith.cmpi eq, %196, %484 : vector<44x16xi32>
      %486 = vector.broadcast %176 : f32 to vector<44x16xf32>
      %487 = arith.select %485, %486, %483 : vector<44x16xi1>, vector<44x16xf32>
      %c6_i32_229 = arith.constant 6 : i32
      %488 = vector.broadcast %c6_i32_229 : i32 to vector<44x16xi32>
      %489 = arith.cmpi eq, %194, %488 : vector<44x16xi32>
      %490 = vector.broadcast %128 : f32 to vector<44x16xf32>
      %491 = arith.select %489, %490, %487 : vector<44x16xi1>, vector<44x16xf32>
      %c6_i32_230 = arith.constant 6 : i32
      %492 = vector.broadcast %c6_i32_230 : i32 to vector<44x16xi32>
      %493 = arith.cmpi eq, %196, %492 : vector<44x16xi32>
      %494 = vector.broadcast %177 : f32 to vector<44x16xf32>
      %495 = arith.select %493, %494, %491 : vector<44x16xi1>, vector<44x16xf32>
      %cst_231 = arith.constant dense<0.000000e+00> : vector<16x16xf32>
      %496 = tpu.matmul %438, %495, %cst_231 {dimension_numbers = #tpu.dot_dimension_numbers<[1], [0], [0], [1], [0, 0, 1, 1], [], []>} : vector<16x44xf32>, vector<44x16xf32>, vector<16x16xf32> -> vector<16x16xf32>
      %497 = arith.addf %437, %496 : vector<16x16xf32>
      %c5_232 = arith.constant 5 : index
      %c0_233 = arith.constant 0 : index
      %498 = vector.load %arg7[%c5_232, %c0_233] : memref<22x44xf32, #tpu.memory_space<vmem>>, vector<16x44xf32>
      %cst_234 = arith.constant 0.000000e+00 : f32
      %499 = vector.broadcast %cst_234 : f32 to vector<44x16xf32>
      %c0_i32_235 = arith.constant 0 : i32
      %500 = vector.broadcast %c0_i32_235 : i32 to vector<44x16xi32>
      %501 = arith.cmpi eq, %194, %500 : vector<44x16xi32>
      %502 = vector.broadcast %129 : f32 to vector<44x16xf32>
      %503 = arith.select %501, %502, %499 : vector<44x16xi1>, vector<44x16xf32>
      %c0_i32_236 = arith.constant 0 : i32
      %504 = vector.broadcast %c0_i32_236 : i32 to vector<44x16xi32>
      %505 = arith.cmpi eq, %196, %504 : vector<44x16xi32>
      %506 = vector.broadcast %178 : f32 to vector<44x16xf32>
      %507 = arith.select %505, %506, %503 : vector<44x16xi1>, vector<44x16xf32>
      %c1_i32_237 = arith.constant 1 : i32
      %508 = vector.broadcast %c1_i32_237 : i32 to vector<44x16xi32>
      %509 = arith.cmpi eq, %194, %508 : vector<44x16xi32>
      %510 = vector.broadcast %130 : f32 to vector<44x16xf32>
      %511 = arith.select %509, %510, %507 : vector<44x16xi1>, vector<44x16xf32>
      %c1_i32_238 = arith.constant 1 : i32
      %512 = vector.broadcast %c1_i32_238 : i32 to vector<44x16xi32>
      %513 = arith.cmpi eq, %196, %512 : vector<44x16xi32>
      %514 = vector.broadcast %179 : f32 to vector<44x16xf32>
      %515 = arith.select %513, %514, %511 : vector<44x16xi1>, vector<44x16xf32>
      %c2_i32_239 = arith.constant 2 : i32
      %516 = vector.broadcast %c2_i32_239 : i32 to vector<44x16xi32>
      %517 = arith.cmpi eq, %194, %516 : vector<44x16xi32>
      %518 = vector.broadcast %131 : f32 to vector<44x16xf32>
      %519 = arith.select %517, %518, %515 : vector<44x16xi1>, vector<44x16xf32>
      %c2_i32_240 = arith.constant 2 : i32
      %520 = vector.broadcast %c2_i32_240 : i32 to vector<44x16xi32>
      %521 = arith.cmpi eq, %196, %520 : vector<44x16xi32>
      %522 = vector.broadcast %180 : f32 to vector<44x16xf32>
      %523 = arith.select %521, %522, %519 : vector<44x16xi1>, vector<44x16xf32>
      %c3_i32_241 = arith.constant 3 : i32
      %524 = vector.broadcast %c3_i32_241 : i32 to vector<44x16xi32>
      %525 = arith.cmpi eq, %194, %524 : vector<44x16xi32>
      %526 = vector.broadcast %132 : f32 to vector<44x16xf32>
      %527 = arith.select %525, %526, %523 : vector<44x16xi1>, vector<44x16xf32>
      %c3_i32_242 = arith.constant 3 : i32
      %528 = vector.broadcast %c3_i32_242 : i32 to vector<44x16xi32>
      %529 = arith.cmpi eq, %196, %528 : vector<44x16xi32>
      %530 = vector.broadcast %181 : f32 to vector<44x16xf32>
      %531 = arith.select %529, %530, %527 : vector<44x16xi1>, vector<44x16xf32>
      %c4_i32_243 = arith.constant 4 : i32
      %532 = vector.broadcast %c4_i32_243 : i32 to vector<44x16xi32>
      %533 = arith.cmpi eq, %194, %532 : vector<44x16xi32>
      %534 = vector.broadcast %133 : f32 to vector<44x16xf32>
      %535 = arith.select %533, %534, %531 : vector<44x16xi1>, vector<44x16xf32>
      %c4_i32_244 = arith.constant 4 : i32
      %536 = vector.broadcast %c4_i32_244 : i32 to vector<44x16xi32>
      %537 = arith.cmpi eq, %196, %536 : vector<44x16xi32>
      %538 = vector.broadcast %182 : f32 to vector<44x16xf32>
      %539 = arith.select %537, %538, %535 : vector<44x16xi1>, vector<44x16xf32>
      %c5_i32_245 = arith.constant 5 : i32
      %540 = vector.broadcast %c5_i32_245 : i32 to vector<44x16xi32>
      %541 = arith.cmpi eq, %194, %540 : vector<44x16xi32>
      %542 = vector.broadcast %134 : f32 to vector<44x16xf32>
      %543 = arith.select %541, %542, %539 : vector<44x16xi1>, vector<44x16xf32>
      %c5_i32_246 = arith.constant 5 : i32
      %544 = vector.broadcast %c5_i32_246 : i32 to vector<44x16xi32>
      %545 = arith.cmpi eq, %196, %544 : vector<44x16xi32>
      %546 = vector.broadcast %183 : f32 to vector<44x16xf32>
      %547 = arith.select %545, %546, %543 : vector<44x16xi1>, vector<44x16xf32>
      %c6_i32_247 = arith.constant 6 : i32
      %548 = vector.broadcast %c6_i32_247 : i32 to vector<44x16xi32>
      %549 = arith.cmpi eq, %194, %548 : vector<44x16xi32>
      %550 = vector.broadcast %135 : f32 to vector<44x16xf32>
      %551 = arith.select %549, %550, %547 : vector<44x16xi1>, vector<44x16xf32>
      %c6_i32_248 = arith.constant 6 : i32
      %552 = vector.broadcast %c6_i32_248 : i32 to vector<44x16xi32>
      %553 = arith.cmpi eq, %196, %552 : vector<44x16xi32>
      %554 = vector.broadcast %184 : f32 to vector<44x16xf32>
      %555 = arith.select %553, %554, %551 : vector<44x16xi1>, vector<44x16xf32>
      %cst_249 = arith.constant dense<0.000000e+00> : vector<16x16xf32>
      %556 = tpu.matmul %498, %555, %cst_249 {dimension_numbers = #tpu.dot_dimension_numbers<[1], [0], [0], [1], [0, 0, 1, 1], [], []>} : vector<16x44xf32>, vector<44x16xf32>, vector<16x16xf32> -> vector<16x16xf32>
      %557 = arith.addf %497, %556 : vector<16x16xf32>
      %c6_250 = arith.constant 6 : index
      %c0_251 = arith.constant 0 : index
      %558 = vector.load %arg7[%c6_250, %c0_251] : memref<22x44xf32, #tpu.memory_space<vmem>>, vector<16x44xf32>
      %cst_252 = arith.constant 0.000000e+00 : f32
      %559 = vector.broadcast %cst_252 : f32 to vector<44x16xf32>
      %c0_i32_253 = arith.constant 0 : i32
      %560 = vector.broadcast %c0_i32_253 : i32 to vector<44x16xi32>
      %561 = arith.cmpi eq, %194, %560 : vector<44x16xi32>
      %562 = vector.broadcast %136 : f32 to vector<44x16xf32>
      %563 = arith.select %561, %562, %559 : vector<44x16xi1>, vector<44x16xf32>
      %c0_i32_254 = arith.constant 0 : i32
      %564 = vector.broadcast %c0_i32_254 : i32 to vector<44x16xi32>
      %565 = arith.cmpi eq, %196, %564 : vector<44x16xi32>
      %566 = vector.broadcast %185 : f32 to vector<44x16xf32>
      %567 = arith.select %565, %566, %563 : vector<44x16xi1>, vector<44x16xf32>
      %c1_i32_255 = arith.constant 1 : i32
      %568 = vector.broadcast %c1_i32_255 : i32 to vector<44x16xi32>
      %569 = arith.cmpi eq, %194, %568 : vector<44x16xi32>
      %570 = vector.broadcast %137 : f32 to vector<44x16xf32>
      %571 = arith.select %569, %570, %567 : vector<44x16xi1>, vector<44x16xf32>
      %c1_i32_256 = arith.constant 1 : i32
      %572 = vector.broadcast %c1_i32_256 : i32 to vector<44x16xi32>
      %573 = arith.cmpi eq, %196, %572 : vector<44x16xi32>
      %574 = vector.broadcast %186 : f32 to vector<44x16xf32>
      %575 = arith.select %573, %574, %571 : vector<44x16xi1>, vector<44x16xf32>
      %c2_i32_257 = arith.constant 2 : i32
      %576 = vector.broadcast %c2_i32_257 : i32 to vector<44x16xi32>
      %577 = arith.cmpi eq, %194, %576 : vector<44x16xi32>
      %578 = vector.broadcast %138 : f32 to vector<44x16xf32>
      %579 = arith.select %577, %578, %575 : vector<44x16xi1>, vector<44x16xf32>
      %c2_i32_258 = arith.constant 2 : i32
      %580 = vector.broadcast %c2_i32_258 : i32 to vector<44x16xi32>
      %581 = arith.cmpi eq, %196, %580 : vector<44x16xi32>
      %582 = vector.broadcast %187 : f32 to vector<44x16xf32>
      %583 = arith.select %581, %582, %579 : vector<44x16xi1>, vector<44x16xf32>
      %c3_i32_259 = arith.constant 3 : i32
      %584 = vector.broadcast %c3_i32_259 : i32 to vector<44x16xi32>
      %585 = arith.cmpi eq, %194, %584 : vector<44x16xi32>
      %586 = vector.broadcast %139 : f32 to vector<44x16xf32>
      %587 = arith.select %585, %586, %583 : vector<44x16xi1>, vector<44x16xf32>
      %c3_i32_260 = arith.constant 3 : i32
      %588 = vector.broadcast %c3_i32_260 : i32 to vector<44x16xi32>
      %589 = arith.cmpi eq, %196, %588 : vector<44x16xi32>
      %590 = vector.broadcast %188 : f32 to vector<44x16xf32>
      %591 = arith.select %589, %590, %587 : vector<44x16xi1>, vector<44x16xf32>
      %c4_i32_261 = arith.constant 4 : i32
      %592 = vector.broadcast %c4_i32_261 : i32 to vector<44x16xi32>
      %593 = arith.cmpi eq, %194, %592 : vector<44x16xi32>
      %594 = vector.broadcast %140 : f32 to vector<44x16xf32>
      %595 = arith.select %593, %594, %591 : vector<44x16xi1>, vector<44x16xf32>
      %c4_i32_262 = arith.constant 4 : i32
      %596 = vector.broadcast %c4_i32_262 : i32 to vector<44x16xi32>
      %597 = arith.cmpi eq, %196, %596 : vector<44x16xi32>
      %598 = vector.broadcast %189 : f32 to vector<44x16xf32>
      %599 = arith.select %597, %598, %595 : vector<44x16xi1>, vector<44x16xf32>
      %c5_i32_263 = arith.constant 5 : i32
      %600 = vector.broadcast %c5_i32_263 : i32 to vector<44x16xi32>
      %601 = arith.cmpi eq, %194, %600 : vector<44x16xi32>
      %602 = vector.broadcast %141 : f32 to vector<44x16xf32>
      %603 = arith.select %601, %602, %599 : vector<44x16xi1>, vector<44x16xf32>
      %c5_i32_264 = arith.constant 5 : i32
      %604 = vector.broadcast %c5_i32_264 : i32 to vector<44x16xi32>
      %605 = arith.cmpi eq, %196, %604 : vector<44x16xi32>
      %606 = vector.broadcast %190 : f32 to vector<44x16xf32>
      %607 = arith.select %605, %606, %603 : vector<44x16xi1>, vector<44x16xf32>
      %c6_i32_265 = arith.constant 6 : i32
      %608 = vector.broadcast %c6_i32_265 : i32 to vector<44x16xi32>
      %609 = arith.cmpi eq, %194, %608 : vector<44x16xi32>
      %610 = vector.broadcast %142 : f32 to vector<44x16xf32>
      %611 = arith.select %609, %610, %607 : vector<44x16xi1>, vector<44x16xf32>
      %c6_i32_266 = arith.constant 6 : i32
      %612 = vector.broadcast %c6_i32_266 : i32 to vector<44x16xi32>
      %613 = arith.cmpi eq, %196, %612 : vector<44x16xi32>
      %614 = vector.broadcast %191 : f32 to vector<44x16xf32>
      %615 = arith.select %613, %614, %611 : vector<44x16xi1>, vector<44x16xf32>
      %cst_267 = arith.constant dense<0.000000e+00> : vector<16x16xf32>
      %616 = tpu.matmul %558, %615, %cst_267 {dimension_numbers = #tpu.dot_dimension_numbers<[1], [0], [0], [1], [0, 0, 1, 1], [], []>} : vector<16x44xf32>, vector<44x16xf32>, vector<16x16xf32> -> vector<16x16xf32>
      %617 = arith.addf %557, %616 : vector<16x16xf32>
      %618 = arith.negf %617 : vector<16x16xf32>
      %619 = math.exp %618 : vector<16x16xf32>
      %cst_268 = arith.constant 1.000000e+00 : f32
      %620 = vector.broadcast %cst_268 : f32 to vector<16x16xf32>
      %621 = arith.addf %620, %619 : vector<16x16xf32>
      %622 = arith.divf %620, %621 : vector<16x16xf32>
      %c0_269 = arith.constant 0 : index
      %c0_270 = arith.constant 0 : index
      %c0_271 = arith.constant 0 : index
      %c0_272 = arith.constant 0 : index
      %623 = vector.load %arg4[%c0_269, %c0_270, %c0_271, %c0_272] : memref<1x1x16x16xf32, #tpu.memory_space<vmem>>, vector<1x1x16x16xf32>
      %624 = vector.shape_cast %623 : vector<1x1x16x16xf32> to vector<16x16xf32>
      %625 = vector.shape_cast %622 : vector<16x16xf32> to vector<1x1x16x16xf32>
      tpu.vector_store %arg4[%c0_269, %c0_270, %c0_271, %c0_272], %625 {strides = array<i32>} : memref<1x1x16x16xf32, #tpu.memory_space<vmem>>, vector<1x1x16x16xf32>,
    } else {
    }
    return
  }
  func.func @transform_0(%arg0: i32, %arg1: i32) -> i32 {
    %c0_i32 = arith.constant 0 : i32
    %c0_i32_0 = arith.constant 0 : i32
    return %c0_i32 : i32
  }
  func.func @transform_1(%arg0: i32, %arg1: i32) -> (i32, i32, i32) {
    %c0_i32 = arith.constant 0 : i32
    %c0_i32_0 = arith.constant 0 : i32
    return %arg0, %arg1, %c0_i32 : i32, i32, i32
  }
  func.func @transform_2(%arg0: i32, %arg1: i32) -> (i32, i32, i32, i32) {
    %c0_i32 = arith.constant 0 : i32
    %c0_i32_0 = arith.constant 0 : i32
    %c0_i32_1 = arith.constant 0 : i32
    %c0_i32_2 = arith.constant 0 : i32
    return %arg0, %c0_i32, %c0_i32_0, %c0_i32_1 : i32, i32, i32, i32
  }
}

</mosaic_0001>

<llo_original>
// kernel: tpu_custom_call.1
$region0: #{tpu_custom_call.1}
  #allocation0 [shape = 'u32[]', space=smem, size = 0x4, offset = 0x4, fixed_abs, tag = 'smem constant byte address 0x4 - core index']
  #allocation1 [shape = 'u32[72,128]{1,0:T(1,128)}', space=vmem, size = 0x9000, scoped, tag = 'internal scratch']
  #allocation2 [shape = 'f32[1,256]{1,0:T(1,128)}', space=vmem, size = 0x400, scoped, tag = 'scratch operand']
  #allocation3 [shape = 'f32[1,256]{1,0:T(1,128)}', space=vmem, size = 0x400, scoped, tag = 'scratch operand']
  #allocation4 [shape = 'f32[22,44]{1,0:T(8,128)}', space=vmem, size = 0x3000, scoped, tag = 'scratch operand']
  %s0 = inlined_call_operand.hbm [shape: f32[98], index: 0, kind: input, shape index: {}]
  %s1 = inlined_call_operand.hbm [shape: f32[2,64,256], index: 1, kind: input, shape index: {}]
  %s2 = inlined_call_operand.hbm [shape: f32[2,1,16,16], index: 2, kind: output, shape index: {}]
  %s3 = sld [smem:[#allocation0]]
  $region57: #{tpu_custom_call.1} parent=0
    _
  %s5 = ssub.s32 1, %s3
  %s6 = scalar_select 0, %s5, %s3
  $region1: #{tpu_custom_call.1} parent=0
    #allocation5 [shape = 'u8[512]{0}', space=smem, size = 0x200, scoped, tag = 'input window, operand 0, single buffered']
    #allocation6 [shape = 's32[2]{0}', space=sflag, size = 0x8, scoped, tag = 'scoped memory for tpu_custom_call.1']
    #allocation7 [shape = 's32[2]{0}', space=sflag, size = 0x8, scoped, tag = 'scoped memory for tpu_custom_call.1']
    #allocation8 [shape = 's32[2]{0}', space=sflag, size = 0x8, scoped, tag = 'scoped memory for tpu_custom_call.1']
    #allocation9 [shape = 'u8[32768]{0}', space=vmem, size = 0x8000, scoped, tag = 'input window, operand 1']
    #allocation10 [shape = 'u8[16384]{0}', space=vmem, size = 0x4000, scoped, tag = 'output window, operand 0']
    %7 = vsyncpa [#allocation8], 0
    %8 = vsyncpa [#allocation6], 0
    %s9 = scalar_lea.sflag [#allocation6], 1
    %10 = vsyncpa %s9, 0
    %11 = vsyncpa [#allocation7], 0
    %s12 = scalar_lea.sflag [#allocation7], 1
    %13 = vsyncpa %s12, 0
    loop: start=0, step=1, limit=10
    $region2: #{tpu_custom_call.1} parent=1 // loop_pre_header
      _
    $region3: #{tpu_custom_call.1} parent=1 // loop_header
      %s15 = sphi 0, %s19
      %p16 = scmp.ge.s32.totalorder %s15, 10
      %s22 = sphi 0, %s34
      %s23 = sphi 0, %s30
      %s24 = sphi 0, %s22
      %s25 = sphi 0, %s23
      %s26 = sphi 0, %s24
      %s27 = sphi 0, %s25
      %s35 = sphi 0, %s35
      %s37 = sphi 0, %s35
      %s38 = sphi 0, %s37
      %s52 = sphi 0, %s38
      %s60 = sphi 0, %s62
      %s63 = sphi 0, %s60
      %s64 = sphi 0, %s63
      %s80 = sphi 0, %s64
      %s86 = sphi 0, %s88
      %s89 = sphi 0, %s86
      %s90 = sphi 0, %s89
      %s106 = sphi 0, %s90
    $region4: #{tpu_custom_call.1} parent=1 // loop_header_branch
      %18 = sbr.rel (%p16) target = $region8
    $region5: #{tpu_custom_call.1} parent=1 // loop_body
      %s20 = ssub.s32 %s15, 1
      %s21 = ssub.s32 %s15, 2
      %s28 = sadd.s32 1, %s23
      %p29 = scmp.ge.s32.totalorder %s28, 4
      %s30 = scalar_select %p29, 0, %s28
      %s31 = sadd.s32 1, %s22
      %s32 = scalar_select %p29, %s31, %s22
      %p33 = scmp.ge.s32.totalorder %s32, 2
      %s34 = scalar_select %p33, 0, %s32
      %s36 = sadd.s32 %s35, 1
      %p39 = scmp.eq.s32.totalorder %s15, 7
      %p40 = scmp.ne.s32.totalorder %s35, %s37
      %p41 = scmp.eq.s32.totalorder %s15, 0
      %p42 = por %p40, %p41
      %p43 = scmp.ne.s32.totalorder %s35, %s37
      %p44 = scmp.eq.s32.totalorder %s20, 7
      %p45 = por %p43, %p44
      %p46 = scmp.ne.s32.totalorder %s37, %s38
      %p47 = scmp.eq.s32.totalorder %s20, 0
      %p48 = por %p46, %p47
      %p49 = scmp.ne.s32.totalorder %s37, %s38
      %p50 = scmp.eq.s32.totalorder %s21, 7
      %p51 = por %p49, %p50
      %p53 = scmp.ne.s32.totalorder %s38, %s52
      %p54 = scmp.eq.s32.totalorder %s21, 0
      %p55 = por %p53, %p54
      %s56 = ssub.s32 %s22, %s34
      %s57 = ssub.s32 %s23, %s30
      %s58 = sor.u32 %s56, %s57
      %p59 = scmp.eq.s32.totalorder %s58, 0
      %s61 = sadd.s32 %s60, 1
      %s62 = scalar_select %p59, %s60, %s61
      %p65 = pneg %p59
      %p66 = scmp.eq.s32.totalorder %s15, 7
      %p67 = por %p65, %p66
      %p68 = scmp.ne.s32.totalorder %s60, %s63
      %p69 = scmp.eq.s32.totalorder %s15, 0
      %p70 = por %p68, %p69
      %p71 = scmp.ne.s32.totalorder %s60, %s63
      %p72 = scmp.eq.s32.totalorder %s20, 7
      %p73 = por %p71, %p72
      %p74 = scmp.ne.s32.totalorder %s63, %s64
      %p75 = scmp.eq.s32.totalorder %s20, 0
      %p76 = por %p74, %p75
      %p77 = scmp.ne.s32.totalorder %s63, %s64
      %p78 = scmp.eq.s32.totalorder %s21, 7
      %p79 = por %p77, %p78
      %p81 = scmp.ne.s32.totalorder %s64, %s80
      %p82 = scmp.eq.s32.totalorder %s21, 0
      %p83 = por %p81, %p82
      %s84 = ssub.s32 %s22, %s34
      %p85 = scmp.eq.s32.totalorder %s84, 0
      %s87 = sadd.s32 %s86, 1
      %s88 = scalar_select %p85, %s86, %s87
      %p91 = pneg %p85
      %p92 = scmp.eq.s32.totalorder %s15, 7
      %p93 = por %p91, %p92
      %p94 = scmp.ne.s32.totalorder %s86, %s89
      %p95 = scmp.eq.s32.totalorder %s15, 0
      %p96 = por %p94, %p95
      %p97 = scmp.ne.s32.totalorder %s86, %s89
      %p98 = scmp.eq.s32.totalorder %s20, 7
      %p99 = por %p97, %p98
      %p100 = scmp.ne.s32.totalorder %s89, %s90
      %p101 = scmp.eq.s32.totalorder %s20, 0
      %p102 = por %p100, %p101
      %p103 = scmp.ne.s32.totalorder %s89, %s90
      %p104 = scmp.eq.s32.totalorder %s21, 7
      %p105 = por %p103, %p104
      %p107 = scmp.ne.s32.totalorder %s90, %s106
      %p108 = scmp.eq.s32.totalorder %s21, 0
      %p109 = por %p107, %p108
      %p110 = scmp.le.s32.totalorder 1, %s15
      %p111 = scmp.lt.s32.totalorder %s15, 9
      %p112 = pnand %p110, %p111
      %p113 = pneg %p112
      // Predicated region
      $region9: #{tpu_custom_call.1} parent=5 // pred_check
        _
      $region10: #{tpu_custom_call.1} parent=5 // pred_check_branch
        %115 = sbr.rel (%p112) target = $region12
      $region11: #{tpu_custom_call.1} parent=5 // pred_region
        %s116 = ssub.s32 %s15, 1
        // Predicated region
        $region13: #{tpu_custom_call.1} parent=11 // pred_check
          %p117 = pneg %p48
        $region14: #{tpu_custom_call.1} parent=11 // pred_check_branch
          %119 = sbr.rel (%p117) target = $region16
        $region15: #{tpu_custom_call.1} parent=11 // pred_region
          %121 = vsyncadd [#allocation8], 0
          %s123 = sshll.u32 %s0, 4
          %s124 = int_to_ptr.hbm [resolvable:$true] %s123
          %126 = dma.hbm_to_smem %s124, 16, [#allocation5], [#allocation8]
        $region16: #{tpu_custom_call.1} parent=11 // pred_fallthru
          _
      $region12: #{tpu_custom_call.1} parent=5 // pred_fallthru
        _
      %p127 = scmp.lt.s32.totalorder %s15, 8
      // Predicated region
      $region17: #{tpu_custom_call.1} parent=5 // pred_check
        %p128 = pneg %p127
      $region18: #{tpu_custom_call.1} parent=5 // pred_check_branch
        %130 = sbr.rel (%p128) target = $region20
      $region19: #{tpu_custom_call.1} parent=5 // pred_region
        // Predicated region
        $region21: #{tpu_custom_call.1} parent=19 // pred_check
          %p131 = pneg %p70
        $region22: #{tpu_custom_call.1} parent=19 // pred_check_branch
          %133 = sbr.rel (%p131) target = $region24
        $region23: #{tpu_custom_call.1} parent=19 // pred_region
          %s134 = sand.u32 %s60, 1
          %s135 = scalar_lea.sflag [#allocation6], %s134
          %s136 = sand.u32 %s60, 1
          %s137 = smul.addr %s136, 32
          %s138 = scalar_lea.vmem [#allocation9], %s137
          %s139 = smul.u32 2, %s23
          %141 = vsyncadd %s135, 0
          %s142 = smul.addr %s139, 2
          %s143 = smul.addr %s22, 16
          %s144 = sadd.s32 %s142, %s143
          %s145 = smul.addr %s144, 8
          %s146 = scalar_lea.hbm %s1, %s145
          %s147 = sshll.u32 %s146, 4
          %s148 = int_to_ptr.hbm [resolvable:$true] %s147
          %s149 = sshll.u32 %s138, 4
          %s150 = int_to_ptr.vmem [resolvable:$true] %s149
          %155 = dma.hbm_to_vmem [thread:$0]  %s148, 512, %s150, %s135, 256, 256, 16
        $region24: #{tpu_custom_call.1} parent=19 // pred_fallthru
          _
      $region20: #{tpu_custom_call.1} parent=5 // pred_fallthru
        _
      %p156 = scmp.le.s32.totalorder 1, %s15
      %p157 = scmp.lt.s32.totalorder %s15, 9
      %p158 = pnand %p156, %p157
      %p159 = pneg %p158
      // Predicated region
      $region25: #{tpu_custom_call.1} parent=5 // pred_check
        _
      $region26: #{tpu_custom_call.1} parent=5 // pred_check_branch
        %161 = sbr.rel (%p158) target = $region28
      $region27: #{tpu_custom_call.1} parent=5 // pred_region
        %s162 = ssub.s32 %s15, 1
        // Predicated region
        $region29: #{tpu_custom_call.1} parent=27 // pred_check
          %p163 = pneg %p48
        $region30: #{tpu_custom_call.1} parent=27 // pred_check_branch
          %165 = sbr.rel (%p163) target = $region32
        $region31: #{tpu_custom_call.1} parent=27 // pred_region
          %167 = dma.done [#allocation8], 16
        $region32: #{tpu_custom_call.1} parent=27 // pred_fallthru
          _
        %s168 = sand.u32 %s63, 1
        %s169 = scalar_lea.sflag [#allocation6], %s168
        %s170 = sand.u32 %s63, 1
        %s171 = smul.addr %s170, 32
        %s172 = scalar_lea.vmem [#allocation9], %s171
        // Predicated region
        $region33: #{tpu_custom_call.1} parent=27 // pred_check
          %p173 = pneg %p76
        $region34: #{tpu_custom_call.1} parent=27 // pred_check_branch
          %175 = sbr.rel (%p173) target = $region36
        $region35: #{tpu_custom_call.1} parent=27 // pred_region
          %177 = dma.done %s169, 512
        $region36: #{tpu_custom_call.1} parent=27 // pred_fallthru
          _
        %178 = sfence
        %p179 = pneg %p48
        %p180 = pneg %p45
        %s181 = sand.u32 %s63, 1
        %s182 = scalar_lea.sflag [#allocation6], %s181
        %s183 = sand.u32 %s63, 1
        %s184 = smul.addr %s183, 32
        %s185 = scalar_lea.vmem [#allocation9], %s184
        %p186 = pneg %p76
        %p187 = pneg %p73
        %p188 = pneg %p102
        %p189 = pneg %p99
        %s190 = sand.u32 %s89, 1
        %s191 = scalar_lea.sflag [#allocation7], %s190
        %s192 = sand.u32 %s89, 1
        %s193 = smul.addr %s192, 16
        %s194 = scalar_lea.vmem [#allocation10], %s193
        %s195 = smul.u32 2, %s25
        %p196 = scmp.eq.s32.totalorder %s25, 0
        // Predicated region
        $region37: #{tpu_custom_call.1} parent=27 // pred_check
          %p197 = pneg %p196
        $region38: #{tpu_custom_call.1} parent=27 // pred_check_branch
          %199 = sbr.rel (%p197) target = $region40
        $region39: #{tpu_custom_call.1} parent=27 // pred_region
          %v200 = vlaneseq
          %vm201 = vcmp.ge.s32.totalorder %v200, 0
          %vm202 = vcmp.lt.s32.totalorder %v200, 256
          %vm203 = vmand %vm201, %vm202
          %204 = vst.msk [vmem:[#allocation2] sm:$0x3] %vm203, 0.0
          %205 = vst.msk [vmem:[#allocation3] sm:$0x3] %vm203, -inf
          %vm206 = vcmask 359424
          %207 = vst.msk [vmem:[#allocation4] sm:$0xff] %vm206, 0.0
          %208 = vst.msk [vmem:[#allocation4 + $0x8] sm:$0xff] %vm206, 0.0
          %vm209 = vcmask 357376
          %210 = vst.msk [vmem:[#allocation4 + $0x10] sm:$0x3f] %vm209, 0.0
        $region40: #{tpu_custom_call.1} parent=27 // pred_fallthru
          _
        %v211 = vld [vmem:[%s172] sm:$0xff]
        %v212 = vld [vmem:[%s172 + $0x8] sm:$0xff]
        %v213 = vld [vmem:[#allocation2] sm:$0x3]
        %v214 = vrot.slane %v211, 4
        %v215 = vadd.f32 %v211, %v214
        %v216 = vrot.slane %v215, 2
        %v217 = vadd.f32 %v215, %v216
        %v218 = vrot.slane %v217, 1
        %v219 = vadd.f32 %v217, %v218
        %v220 = vrot.slane %v212, 4
        %v221 = vadd.f32 %v212, %v220
        %v222 = vrot.slane %v221, 2
        %v223 = vadd.f32 %v221, %v222
        %v224 = vrot.slane %v223, 1
        %v225 = vadd.f32 %v223, %v224
        %v228 = vrot.slane %v225, 7
        %vm229 = vcmask 1040384
        %v230 = vsel %vm229, %v219, %v228
        %v232 = vadd.f32 %v213, %v230
        %v233 = vlaneseq
        %vm234 = vcmp.ge.s32.totalorder %v233, 0
        %vm235 = vcmp.lt.s32.totalorder %v233, 256
        %vm236 = vmand %vm234, %vm235
        %237 = vst.msk [vmem:[#allocation2] sm:$0x3] %vm236, %v232
        %v238 = vld [vmem:[#allocation3] sm:$0x3]
        %v239 = vrot.slane %v211, 4
        %v240 = vmax.f32 %v211, %v239
        %v241 = vrot.slane %v240, 2
        %v242 = vmax.f32 %v240, %v241
        %v243 = vrot.slane %v242, 1
        %v244 = vmax.f32 %v242, %v243
        %v245 = vrot.slane %v212, 4
        %v246 = vmax.f32 %v212, %v245
        %v247 = vrot.slane %v246, 2
        %v248 = vmax.f32 %v246, %v247
        %v249 = vrot.slane %v248, 1
        %v250 = vmax.f32 %v248, %v249
        %v253 = vrot.slane %v250, 7
        %v254 = vsel %vm229, %v244, %v253
        %v256 = vmax.f32 %v238, %v254
        %257 = vst.msk [vmem:[#allocation3] sm:$0x3] %vm236, %v256
        %v258 = vld [vmem:[%s172 + $0x10] sm:$0xff]
        %v259 = vld [vmem:[%s172 + $0x18] sm:$0xff]
        %v260 = vld [vmem:[#allocation2] sm:$0x3]
        %v261 = vrot.slane %v258, 4
        %v262 = vadd.f32 %v258, %v261
        %v263 = vrot.slane %v262, 2
        %v264 = vadd.f32 %v262, %v263
        %v265 = vrot.slane %v264, 1
        %v266 = vadd.f32 %v264, %v265
        %v267 = vrot.slane %v259, 4
        %v268 = vadd.f32 %v259, %v267
        %v269 = vrot.slane %v268, 2
        %v270 = vadd.f32 %v268, %v269
        %v271 = vrot.slane %v270, 1
        %v272 = vadd.f32 %v270, %v271
        %v275 = vrot.slane %v272, 7
        %v276 = vsel %vm229, %v266, %v275
        %v278 = vadd.f32 %v260, %v276
        %279 = vst.msk [vmem:[#allocation2] sm:$0x3] %vm236, %v278
        %v280 = vld [vmem:[#allocation3] sm:$0x3]
        %v281 = vrot.slane %v258, 4
        %v282 = vmax.f32 %v258, %v281
        %v283 = vrot.slane %v282, 2
        %v284 = vmax.f32 %v282, %v283
        %v285 = vrot.slane %v284, 1
        %v286 = vmax.f32 %v284, %v285
        %v287 = vrot.slane %v259, 4
        %v288 = vmax.f32 %v259, %v287
        %v289 = vrot.slane %v288, 2
        %v290 = vmax.f32 %v288, %v289
        %v291 = vrot.slane %v290, 1
        %v292 = vmax.f32 %v290, %v291
        %v295 = vrot.slane %v292, 7
        %v296 = vsel %vm229, %v286, %v295
        %v298 = vmax.f32 %v280, %v296
        %299 = vst.msk [vmem:[#allocation3] sm:$0x3] %vm236, %v298
        %p300 = scmp.eq.s32.totalorder %s25, 3
        // Predicated region
        $region41: #{tpu_custom_call.1} parent=27 // pred_check
          %p301 = pneg %p300
        $region42: #{tpu_custom_call.1} parent=27 // pred_check_branch
          %303 = sbr.rel (%p301) target = $region44
        $region43: #{tpu_custom_call.1} parent=27 // pred_region
          %v304 = vld [vmem:[#allocation2] sm:$0x1]
          %v306 = vperm.slane %v304, 0
          %307 = vrot.lane.b32.xlu0 %v306, 3
          %v308 = vpop.permute.xlu0 %307
          %vm310 = vcmask 147480
          %311 = vst.msk [vmem:[#allocation4 + $0x3] sm:$0x1] %vm310, %v308
          %v312 = vld [vmem:[#allocation3] sm:$0x1]
          %v314 = vperm.slane %v312, 0
          %315 = vrot.lane.b32.xlu0 %v314, 25
          %v316 = vpop.permute.xlu0 %315
          %vm318 = vcmask 327880
          %319 = vst.msk [vmem:[#allocation4 + $0x3] sm:$0x1] %vm318, %v316
          %v320 = vld [vmem:[#allocation2] sm:$0x1]
          %v322 = vperm.slane %v320, 0
          %323 = vrot.lane.b32.xlu0 %v322, 115
          %v324 = vpop.permute.xlu0 %323
          %326 = vst.msk [vmem:[#allocation4 + $0x4] sm:$0x1] %vm310, %v324
          %v327 = vld [vmem:[#allocation3] sm:$0x1]
          %v329 = vperm.slane %v327, 0
          %330 = vrot.lane.b32.xlu0 %v329, 9
          %v331 = vpop.permute.xlu0 %330
          %333 = vst.msk [vmem:[#allocation4 + $0x4] sm:$0x1] %vm318, %v331
          %v334 = vld [vmem:[#allocation2] sm:$0x1]
          %v336 = vperm.slane %v334, 0
          %337 = vrot.lane.b32.xlu0 %v336, 99
          %v338 = vpop.permute.xlu0 %337
          %340 = vst.msk [vmem:[#allocation4 + $0x5] sm:$0x1] %vm310, %v338
          %v341 = vld [vmem:[#allocation3] sm:$0x1]
          %v343 = vperm.slane %v341, 0
          %344 = vrot.lane.b32.xlu0 %v343, 121
          %v345 = vpop.permute.xlu0 %344
          %347 = vst.msk [vmem:[#allocation4 + $0x5] sm:$0x1] %vm318, %v345
          %v348 = vld [vmem:[#allocation2] sm:$0x1]
          %v350 = vperm.slane %v348, 0
          %351 = vrot.lane.b32.xlu0 %v350, 83
          %v352 = vpop.permute.xlu0 %351
          %354 = vst.msk [vmem:[#allocation4 + $0x6] sm:$0x1] %vm310, %v352
          %v355 = vld [vmem:[#allocation3] sm:$0x1]
          %v357 = vperm.slane %v355, 0
          %358 = vrot.lane.b32.xlu0 %v357, 105
          %v359 = vpop.permute.xlu0 %358
          %361 = vst.msk [vmem:[#allocation4 + $0x6] sm:$0x1] %vm318, %v359
          %v362 = vld [vmem:[#allocation2] sm:$0x1]
          %v364 = vperm.slane %v362, 0
          %365 = vrot.lane.b32.xlu0 %v364, 67
          %v366 = vpop.permute.xlu0 %365
          %368 = vst.msk [vmem:[#allocation4 + $0x7] sm:$0x1] %vm310, %v366
          %v369 = vld [vmem:[#allocation3] sm:$0x1]
          %v371 = vperm.slane %v369, 0
          %372 = vrot.lane.b32.xlu0 %v371, 89
          %v373 = vpop.permute.xlu0 %372
          %375 = vst.msk [vmem:[#allocation4 + $0x7] sm:$0x1] %vm318, %v373
          %v376 = vld [vmem:[#allocation2] sm:$0x1]
          %v378 = vperm.slane %v376, 0
          %379 = vrot.lane.b32.xlu0 %v378, 51
          %v380 = vpop.permute.xlu0 %379
          %382 = vst.msk [vmem:[#allocation4 + $0x8] sm:$0x1] %vm310, %v380
          %v383 = vld [vmem:[#allocation3] sm:$0x1]
          %v385 = vperm.slane %v383, 0
          %386 = vrot.lane.b32.xlu0 %v385, 73
          %v387 = vpop.permute.xlu0 %386
          %389 = vst.msk [vmem:[#allocation4 + $0x8] sm:$0x1] %vm318, %v387
          %v390 = vld [vmem:[#allocation2] sm:$0x1]
          %v392 = vperm.slane %v390, 0
          %393 = vrot.lane.b32.xlu0 %v392, 35
          %v394 = vpop.permute.xlu0 %393
          %396 = vst.msk [vmem:[#allocation4 + $0x9] sm:$0x1] %vm310, %v394
          %v397 = vld [vmem:[#allocation3] sm:$0x1]
          %v399 = vperm.slane %v397, 0
          %400 = vrot.lane.b32.xlu0 %v399, 57
          %v401 = vpop.permute.xlu0 %400
          %403 = vst.msk [vmem:[#allocation4 + $0x9] sm:$0x1] %vm318, %v401
          %v404 = vld [vmem:[#allocation2] sm:$0x1]
          %v406 = vperm.slane %v404, 0
          %407 = vrot.lane.b32.xlu0 %v406, 19
          %v408 = vpop.permute.xlu0 %407
          %410 = vst.msk [vmem:[#allocation4 + $0xa] sm:$0x1] %vm310, %v408
          %v411 = vld [vmem:[#allocation3] sm:$0x1]
          %v413 = vperm.slane %v411, 0
          %414 = vrot.lane.b32.xlu0 %v413, 41
          %v415 = vpop.permute.xlu0 %414
          %417 = vst.msk [vmem:[#allocation4 + $0xa] sm:$0x1] %vm318, %v415
          %v418 = vld [vmem:[#allocation2 + $0x1] sm:$0x1]
          %v420 = vperm.slane %v418, 0
          %421 = vrot.lane.b32.xlu0 %v420, 3
          %v422 = vpop.permute.xlu0 %421
          %424 = vst.msk [vmem:[#allocation4 + $0xb] sm:$0x1] %vm310, %v422
          %v425 = vld [vmem:[#allocation3 + $0x1] sm:$0x1]
          %v427 = vperm.slane %v425, 0
          %428 = vrot.lane.b32.xlu0 %v427, 25
          %v429 = vpop.permute.xlu0 %428
          %431 = vst.msk [vmem:[#allocation4 + $0xb] sm:$0x1] %vm318, %v429
          %v432 = vld [vmem:[#allocation2 + $0x1] sm:$0x1]
          %v434 = vperm.slane %v432, 0
          %435 = vrot.lane.b32.xlu0 %v434, 115
          %v436 = vpop.permute.xlu0 %435
          %438 = vst.msk [vmem:[#allocation4 + $0xc] sm:$0x1] %vm310, %v436
          %v439 = vld [vmem:[#allocation3 + $0x1] sm:$0x1]
          %v441 = vperm.slane %v439, 0
          %442 = vrot.lane.b32.xlu0 %v441, 9
          %v443 = vpop.permute.xlu0 %442
          %445 = vst.msk [vmem:[#allocation4 + $0xc] sm:$0x1] %vm318, %v443
          %v446 = vld [vmem:[#allocation2 + $0x1] sm:$0x1]
          %v448 = vperm.slane %v446, 0
          %449 = vrot.lane.b32.xlu0 %v448, 99
          %v450 = vpop.permute.xlu0 %449
          %452 = vst.msk [vmem:[#allocation4 + $0xd] sm:$0x1] %vm310, %v450
          %v453 = vld [vmem:[#allocation3 + $0x1] sm:$0x1]
          %v455 = vperm.slane %v453, 0
          %456 = vrot.lane.b32.xlu0 %v455, 121
          %v457 = vpop.permute.xlu0 %456
          %459 = vst.msk [vmem:[#allocation4 + $0xd] sm:$0x1] %vm318, %v457
          %v460 = vld [vmem:[#allocation2 + $0x1] sm:$0x1]
          %v462 = vperm.slane %v460, 0
          %463 = vrot.lane.b32.xlu0 %v462, 83
          %v464 = vpop.permute.xlu0 %463
          %466 = vst.msk [vmem:[#allocation4 + $0xe] sm:$0x1] %vm310, %v464
          %v467 = vld [vmem:[#allocation3 + $0x1] sm:$0x1]
          %v469 = vperm.slane %v467, 0
          %470 = vrot.lane.b32.xlu0 %v469, 105
          %v471 = vpop.permute.xlu0 %470
          %473 = vst.msk [vmem:[#allocation4 + $0xe] sm:$0x1] %vm318, %v471
          %v474 = vld [vmem:[#allocation2 + $0x1] sm:$0x1]
          %v476 = vperm.slane %v474, 0
          %477 = vrot.lane.b32.xlu0 %v476, 67
          %v478 = vpop.permute.xlu0 %477
          %480 = vst.msk [vmem:[#allocation4 + $0xf] sm:$0x1] %vm310, %v478
          %v481 = vld [vmem:[#allocation3 + $0x1] sm:$0x1]
          %v483 = vperm.slane %v481, 0
          %484 = vrot.lane.b32.xlu0 %v483, 89
          %v485 = vpop.permute.xlu0 %484
          %487 = vst.msk [vmem:[#allocation4 + $0xf] sm:$0x1] %vm318, %v485
          %v488 = vld [vmem:[#allocation2 + $0x1] sm:$0x1]
          %v490 = vperm.slane %v488, 0
          %491 = vrot.lane.b32.xlu0 %v490, 51
          %v492 = vpop.permute.xlu0 %491
          %494 = vst.msk [vmem:[#allocation4 + $0x10] sm:$0x1] %vm310, %v492
          %v495 = vld [vmem:[#allocation3 + $0x1] sm:$0x1]
          %v497 = vperm.slane %v495, 0
          %498 = vrot.lane.b32.xlu0 %v497, 73
          %v499 = vpop.permute.xlu0 %498
          %501 = vst.msk [vmem:[#allocation4 + $0x10] sm:$0x1] %vm318, %v499
          %v502 = vld [vmem:[#allocation2 + $0x1] sm:$0x1]
          %v504 = vperm.slane %v502, 0
          %505 = vrot.lane.b32.xlu0 %v504, 35
          %v506 = vpop.permute.xlu0 %505
          %508 = vst.msk [vmem:[#allocation4 + $0x11] sm:$0x1] %vm310, %v506
          %v509 = vld [vmem:[#allocation3 + $0x1] sm:$0x1]
          %v511 = vperm.slane %v509, 0
          %512 = vrot.lane.b32.xlu0 %v511, 57
          %v513 = vpop.permute.xlu0 %512
          %515 = vst.msk [vmem:[#allocation4 + $0x11] sm:$0x1] %vm318, %v513
          %v516 = vld [vmem:[#allocation2 + $0x1] sm:$0x1]
          %v518 = vperm.slane %v516, 0
          %519 = vrot.lane.b32.xlu0 %v518, 19
          %v520 = vpop.permute.xlu0 %519
          %522 = vst.msk [vmem:[#allocation4 + $0x12] sm:$0x1] %vm310, %v520
          %v523 = vld [vmem:[#allocation3 + $0x1] sm:$0x1]
          %v525 = vperm.slane %v523, 0
          %526 = vrot.lane.b32.xlu0 %v525, 41
          %v527 = vpop.permute.xlu0 %526
          %529 = vst.msk [vmem:[#allocation4 + $0x12] sm:$0x1] %vm318, %v527
          %s530 = sld [smem:[#allocation5]]
          %s531 = sld [smem:[#allocation5 + $0x1]]
          %s532 = sld [smem:[#allocation5 + $0x2]]
          %s533 = sld [smem:[#allocation5 + $0x3]]
          %s534 = sld [smem:[#allocation5 + $0x4]]
          %s535 = sld [smem:[#allocation5 + $0x5]]
          %s536 = sld [smem:[#allocation5 + $0x6]]
          %s537 = sld [smem:[#allocation5 + $0x7]]
          %s538 = sld [smem:[#allocation5 + $0x8]]
          %s539 = sld [smem:[#allocation5 + $0x9]]
          %s540 = sld [smem:[#allocation5 + $0xa]]
          %s541 = sld [smem:[#allocation5 + $0xb]]
          %s542 = sld [smem:[#allocation5 + $0xc]]
          %s543 = sld [smem:[#allocation5 + $0xd]]
          %s544 = sld [smem:[#allocation5 + $0xe]]
          %s545 = sld [smem:[#allocation5 + $0xf]]
          %s546 = sld [smem:[#allocation5 + $0x10]]
          %s547 = sld [smem:[#allocation5 + $0x11]]
          %s548 = sld [smem:[#allocation5 + $0x12]]
          %s549 = sld [smem:[#allocation5 + $0x13]]
          %s550 = sld [smem:[#allocation5 + $0x14]]
          %s551 = sld [smem:[#allocation5 + $0x15]]
          %s552 = sld [smem:[#allocation5 + $0x16]]
          %s553 = sld [smem:[#allocation5 + $0x17]]
          %s554 = sld [smem:[#allocation5 + $0x18]]
          %s555 = sld [smem:[#allocation5 + $0x19]]
          %s556 = sld [smem:[#allocation5 + $0x1a]]
          %s557 = sld [smem:[#allocation5 + $0x1b]]
          %s558 = sld [smem:[#allocation5 + $0x1c]]
          %s559 = sld [smem:[#allocation5 + $0x1d]]
          %s560 = sld [smem:[#allocation5 + $0x1e]]
          %s561 = sld [smem:[#allocation5 + $0x1f]]
          %s562 = sld [smem:[#allocation5 + $0x20]]
          %s563 = sld [smem:[#allocation5 + $0x21]]
          %s564 = sld [smem:[#allocation5 + $0x22]]
          %s565 = sld [smem:[#allocation5 + $0x23]]
          %s566 = sld [smem:[#allocation5 + $0x24]]
          %s567 = sld [smem:[#allocation5 + $0x25]]
          %s568 = sld [smem:[#allocation5 + $0x26]]
          %s569 = sld [smem:[#allocation5 + $0x27]]
          %s570 = sld [smem:[#allocation5 + $0x28]]
          %s571 = sld [smem:[#allocation5 + $0x29]]
          %s572 = sld [smem:[#allocation5 + $0x2a]]
          %s573 = sld [smem:[#allocation5 + $0x2b]]
          %s574 = sld [smem:[#allocation5 + $0x2c]]
          %s575 = sld [smem:[#allocation5 + $0x2d]]
          %s576 = sld [smem:[#allocation5 + $0x2e]]
          %s577 = sld [smem:[#allocation5 + $0x2f]]
          %s578 = sld [smem:[#allocation5 + $0x30]]
          %s579 = sld [smem:[#allocation5 + $0x31]]
          %s580 = sld [smem:[#allocation5 + $0x32]]
          %s581 = sld [smem:[#allocation5 + $0x33]]
          %s582 = sld [smem:[#allocation5 + $0x34]]
          %s583 = sld [smem:[#allocation5 + $0x35]]
          %s584 = sld [smem:[#allocation5 + $0x36]]
          %s585 = sld [smem:[#allocation5 + $0x37]]
          %s586 = sld [smem:[#allocation5 + $0x38]]
          %s587 = sld [smem:[#allocation5 + $0x39]]
          %s588 = sld [smem:[#allocation5 + $0x3a]]
          %s589 = sld [smem:[#allocation5 + $0x3b]]
          %s590 = sld [smem:[#allocation5 + $0x3c]]
          %s591 = sld [smem:[#allocation5 + $0x3d]]
          %s592 = sld [smem:[#allocation5 + $0x3e]]
          %s593 = sld [smem:[#allocation5 + $0x3f]]
          %s594 = sld [smem:[#allocation5 + $0x40]]
          %s595 = sld [smem:[#allocation5 + $0x41]]
          %s596 = sld [smem:[#allocation5 + $0x42]]
          %s597 = sld [smem:[#allocation5 + $0x43]]
          %s598 = sld [smem:[#allocation5 + $0x44]]
          %s599 = sld [smem:[#allocation5 + $0x45]]
          %s600 = sld [smem:[#allocation5 + $0x46]]
          %s601 = sld [smem:[#allocation5 + $0x47]]
          %s602 = sld [smem:[#allocation5 + $0x48]]
          %s603 = sld [smem:[#allocation5 + $0x49]]
          %s604 = sld [smem:[#allocation5 + $0x4a]]
          %s605 = sld [smem:[#allocation5 + $0x4b]]
          %s606 = sld [smem:[#allocation5 + $0x4c]]
          %s607 = sld [smem:[#allocation5 + $0x4d]]
          %s608 = sld [smem:[#allocation5 + $0x4e]]
          %s609 = sld [smem:[#allocation5 + $0x4f]]
          %s610 = sld [smem:[#allocation5 + $0x50]]
          %s611 = sld [smem:[#allocation5 + $0x51]]
          %s612 = sld [smem:[#allocation5 + $0x52]]
          %s613 = sld [smem:[#allocation5 + $0x53]]
          %s614 = sld [smem:[#allocation5 + $0x54]]
          %s615 = sld [smem:[#allocation5 + $0x55]]
          %s616 = sld [smem:[#allocation5 + $0x56]]
          %s617 = sld [smem:[#allocation5 + $0x57]]
          %s618 = sld [smem:[#allocation5 + $0x58]]
          %s619 = sld [smem:[#allocation5 + $0x59]]
          %s620 = sld [smem:[#allocation5 + $0x5a]]
          %s621 = sld [smem:[#allocation5 + $0x5b]]
          %s622 = sld [smem:[#allocation5 + $0x5c]]
          %s623 = sld [smem:[#allocation5 + $0x5d]]
          %s624 = sld [smem:[#allocation5 + $0x5e]]
          %s625 = sld [smem:[#allocation5 + $0x5f]]
          %s626 = sld [smem:[#allocation5 + $0x60]]
          %s627 = sld [smem:[#allocation5 + $0x61]]
          %v628 = vlaneseq
          %v629 = vshrl.u32 %v628, 7
          %v630 = vadd.s32 %v629, 8
          %v631 = vadd.s32 %v629, 16
          %v632 = vadd.s32 %v629, 24
          %v633 = vadd.s32 %v629, 32
          %v634 = vadd.s32 %v629, 40
          %v635 = vlaneseq
          %v636 = vand.u32 %v635, 127
          %v637 = vsub.s32 %v629, %v636
          %v638 = vsub.s32 %v630, %v636
          %v639 = vsub.s32 %v631, %v636
          %v640 = vsub.s32 %v632, %v636
          %v641 = vsub.s32 %v633, %v636
          %v642 = vsub.s32 %v634, %v636
          %v643 = vsub.s32 %v637, 22
          %v644 = vsub.s32 %v638, 22
          %v645 = vsub.s32 %v639, 22
          %v646 = vsub.s32 %v640, 22
          %v647 = vsub.s32 %v641, 22
          %v648 = vsub.s32 %v642, 22
          %v649 = vld [vmem:[#allocation4] sm:$0xff]
          %v650 = vld [vmem:[#allocation4 + $0x8] sm:$0xff]
          %vm651 = vcmp.eq.s32.totalorder %v637, 0
          %vm652 = vcmp.eq.s32.totalorder %v638, 0
          %vm653 = vcmp.eq.s32.totalorder %v639, 0
          %vm654 = vcmp.eq.s32.totalorder %v640, 0
          %vm655 = vcmp.eq.s32.totalorder %v641, 0
          %vm656 = vcmp.eq.s32.totalorder %v642, 0
          %v657 = vstv %s530
          %v658 = vsel %vm651, %v657, 0.0
          %v659 = vsel %vm652, %v657, 0.0
          %v660 = vsel %vm653, %v657, 0.0
          %v661 = vsel %vm654, %v657, 0.0
          %v662 = vsel %vm655, %v657, 0.0
          %v663 = vsel %vm656, %v657, 0.0
          %vm664 = vcmp.eq.s32.totalorder %v643, 0
          %vm665 = vcmp.eq.s32.totalorder %v644, 0
          %vm666 = vcmp.eq.s32.totalorder %v645, 0
          %vm667 = vcmp.eq.s32.totalorder %v646, 0
          %vm668 = vcmp.eq.s32.totalorder %v647, 0
          %vm669 = vcmp.eq.s32.totalorder %v648, 0
          %v670 = vstv %s579
          %v671 = vsel %vm664, %v670, %v658
          %v672 = vsel %vm665, %v670, %v659
          %v673 = vsel %vm666, %v670, %v660
          %v674 = vsel %vm667, %v670, %v661
          %v675 = vsel %vm668, %v670, %v662
          %v676 = vsel %vm669, %v670, %v663
          %vm677 = vcmp.eq.s32.totalorder %v637, 1
          %vm678 = vcmp.eq.s32.totalorder %v638, 1
          %vm679 = vcmp.eq.s32.totalorder %v639, 1
          %vm680 = vcmp.eq.s32.totalorder %v640, 1
          %vm681 = vcmp.eq.s32.totalorder %v641, 1
          %vm682 = vcmp.eq.s32.totalorder %v642, 1
          %v683 = vstv %s531
          %v684 = vsel %vm677, %v683, %v671
          %v685 = vsel %vm678, %v683, %v672
          %v686 = vsel %vm679, %v683, %v673
          %v687 = vsel %vm680, %v683, %v674
          %v688 = vsel %vm681, %v683, %v675
          %v689 = vsel %vm682, %v683, %v676
          %vm690 = vcmp.eq.s32.totalorder %v643, 1
          %vm691 = vcmp.eq.s32.totalorder %v644, 1
          %vm692 = vcmp.eq.s32.totalorder %v645, 1
          %vm693 = vcmp.eq.s32.totalorder %v646, 1
          %vm694 = vcmp.eq.s32.totalorder %v647, 1
          %vm695 = vcmp.eq.s32.totalorder %v648, 1
          %v696 = vstv %s580
          %v697 = vsel %vm690, %v696, %v684
          %v698 = vsel %vm691, %v696, %v685
          %v699 = vsel %vm692, %v696, %v686
          %v700 = vsel %vm693, %v696, %v687
          %v701 = vsel %vm694, %v696, %v688
          %v702 = vsel %vm695, %v696, %v689
          %vm703 = vcmp.eq.s32.totalorder %v637, 2
          %vm704 = vcmp.eq.s32.totalorder %v638, 2
          %vm705 = vcmp.eq.s32.totalorder %v639, 2
          %vm706 = vcmp.eq.s32.totalorder %v640, 2
          %vm707 = vcmp.eq.s32.totalorder %v641, 2
          %vm708 = vcmp.eq.s32.totalorder %v642, 2
          %v709 = vstv %s532
          %v710 = vsel %vm703, %v709, %v697
          %v711 = vsel %vm704, %v709, %v698
          %v712 = vsel %vm705, %v709, %v699
          %v713 = vsel %vm706, %v709, %v700
          %v714 = vsel %vm707, %v709, %v701
          %v715 = vsel %vm708, %v709, %v702
          %vm716 = vcmp.eq.s32.totalorder %v643, 2
          %vm717 = vcmp.eq.s32.totalorder %v644, 2
          %vm718 = vcmp.eq.s32.totalorder %v645, 2
          %vm719 = vcmp.eq.s32.totalorder %v646, 2
          %vm720 = vcmp.eq.s32.totalorder %v647, 2
          %vm721 = vcmp.eq.s32.totalorder %v648, 2
          %v722 = vstv %s581
          %v723 = vsel %vm716, %v722, %v710
          %v724 = vsel %vm717, %v722, %v711
          %v725 = vsel %vm718, %v722, %v712
          %v726 = vsel %vm719, %v722, %v713
          %v727 = vsel %vm720, %v722, %v714
          %v728 = vsel %vm721, %v722, %v715
          %vm729 = vcmp.eq.s32.totalorder %v637, 3
          %vm730 = vcmp.eq.s32.totalorder %v638, 3
          %vm731 = vcmp.eq.s32.totalorder %v639, 3
          %vm732 = vcmp.eq.s32.totalorder %v640, 3
          %vm733 = vcmp.eq.s32.totalorder %v641, 3
          %vm734 = vcmp.eq.s32.totalorder %v642, 3
          %v735 = vstv %s533
          %v736 = vsel %vm729, %v735, %v723
          %v737 = vsel %vm730, %v735, %v724
          %v738 = vsel %vm731, %v735, %v725
          %v739 = vsel %vm732, %v735, %v726
          %v740 = vsel %vm733, %v735, %v727
          %v741 = vsel %vm734, %v735, %v728
          %vm742 = vcmp.eq.s32.totalorder %v643, 3
          %vm743 = vcmp.eq.s32.totalorder %v644, 3
          %vm744 = vcmp.eq.s32.totalorder %v645, 3
          %vm745 = vcmp.eq.s32.totalorder %v646, 3
          %vm746 = vcmp.eq.s32.totalorder %v647, 3
          %vm747 = vcmp.eq.s32.totalorder %v648, 3
          %v748 = vstv %s582
          %v749 = vsel %vm742, %v748, %v736
          %v750 = vsel %vm743, %v748, %v737
          %v751 = vsel %vm744, %v748, %v738
          %v752 = vsel %vm745, %v748, %v739
          %v753 = vsel %vm746, %v748, %v740
          %v754 = vsel %vm747, %v748, %v741
          %vm755 = vcmp.eq.s32.totalorder %v637, 4
          %vm756 = vcmp.eq.s32.totalorder %v638, 4
          %vm757 = vcmp.eq.s32.totalorder %v639, 4
          %vm758 = vcmp.eq.s32.totalorder %v640, 4
          %vm759 = vcmp.eq.s32.totalorder %v641, 4
          %vm760 = vcmp.eq.s32.totalorder %v642, 4
          %v761 = vstv %s534
          %v762 = vsel %vm755, %v761, %v749
          %v763 = vsel %vm756, %v761, %v750
          %v764 = vsel %vm757, %v761, %v751
          %v765 = vsel %vm758, %v761, %v752
          %v766 = vsel %vm759, %v761, %v753
          %v767 = vsel %vm760, %v761, %v754
          %vm768 = vcmp.eq.s32.totalorder %v643, 4
          %vm769 = vcmp.eq.s32.totalorder %v644, 4
          %vm770 = vcmp.eq.s32.totalorder %v645, 4
          %vm771 = vcmp.eq.s32.totalorder %v646, 4
          %vm772 = vcmp.eq.s32.totalorder %v647, 4
          %vm773 = vcmp.eq.s32.totalorder %v648, 4
          %v774 = vstv %s583
          %v775 = vsel %vm768, %v774, %v762
          %v776 = vsel %vm769, %v774, %v763
          %v777 = vsel %vm770, %v774, %v764
          %v778 = vsel %vm771, %v774, %v765
          %v779 = vsel %vm772, %v774, %v766
          %v780 = vsel %vm773, %v774, %v767
          %vm781 = vcmp.eq.s32.totalorder %v637, 5
          %vm782 = vcmp.eq.s32.totalorder %v638, 5
          %vm783 = vcmp.eq.s32.totalorder %v639, 5
          %vm784 = vcmp.eq.s32.totalorder %v640, 5
          %vm785 = vcmp.eq.s32.totalorder %v641, 5
          %vm786 = vcmp.eq.s32.totalorder %v642, 5
          %v787 = vstv %s535
          %v788 = vsel %vm781, %v787, %v775
          %v789 = vsel %vm782, %v787, %v776
          %v790 = vsel %vm783, %v787, %v777
          %v791 = vsel %vm784, %v787, %v778
          %v792 = vsel %vm785, %v787, %v779
          %v793 = vsel %vm786, %v787, %v780
          %vm794 = vcmp.eq.s32.totalorder %v643, 5
          %vm795 = vcmp.eq.s32.totalorder %v644, 5
          %vm796 = vcmp.eq.s32.totalorder %v645, 5
          %vm797 = vcmp.eq.s32.totalorder %v646, 5
          %vm798 = vcmp.eq.s32.totalorder %v647, 5
          %vm799 = vcmp.eq.s32.totalorder %v648, 5
          %v800 = vstv %s584
          %v801 = vsel %vm794, %v800, %v788
          %v802 = vsel %vm795, %v800, %v789
          %v803 = vsel %vm796, %v800, %v790
          %v804 = vsel %vm797, %v800, %v791
          %v805 = vsel %vm798, %v800, %v792
          %v806 = vsel %vm799, %v800, %v793
          %vm807 = vcmp.eq.s32.totalorder %v637, 6
          %vm808 = vcmp.eq.s32.totalorder %v638, 6
          %vm809 = vcmp.eq.s32.totalorder %v639, 6
          %vm810 = vcmp.eq.s32.totalorder %v640, 6
          %vm811 = vcmp.eq.s32.totalorder %v641, 6
          %vm812 = vcmp.eq.s32.totalorder %v642, 6
          %v813 = vstv %s536
          %v814 = vsel %vm807, %v813, %v801
          %v815 = vsel %vm808, %v813, %v802
          %v816 = vsel %vm809, %v813, %v803
          %v817 = vsel %vm810, %v813, %v804
          %v818 = vsel %vm811, %v813, %v805
          %v819 = vsel %vm812, %v813, %v806
          %vm820 = vcmp.eq.s32.totalorder %v643, 6
          %vm821 = vcmp.eq.s32.totalorder %v644, 6
          %vm822 = vcmp.eq.s32.totalorder %v645, 6
          %vm823 = vcmp.eq.s32.totalorder %v646, 6
          %vm824 = vcmp.eq.s32.totalorder %v647, 6
          %vm825 = vcmp.eq.s32.totalorder %v648, 6
          %v826 = vstv %s585
          %v827 = vsel %vm820, %v826, %v814
          %v828 = vsel %vm821, %v826, %v815
          %v829 = vsel %vm822, %v826, %v816
          %v830 = vsel %vm823, %v826, %v817
          %v831 = vsel %vm824, %v826, %v818
          %v832 = vsel %vm825, %v826, %v819
          %v833 = vld [vmem:[#allocation4 + $0x1] sm:$0xff]
          %v834 = vld [vmem:[#allocation4 + $0x9] sm:$0xff]
          %v835 = vstv %s537
          %v836 = vsel %vm651, %v835, 0.0
          %v837 = vsel %vm652, %v835, 0.0
          %v838 = vsel %vm653, %v835, 0.0
          %v839 = vsel %vm654, %v835, 0.0
          %v840 = vsel %vm655, %v835, 0.0
          %v841 = vsel %vm656, %v835, 0.0
          %v842 = vstv %s586
          %v843 = vsel %vm664, %v842, %v836
          %v844 = vsel %vm665, %v842, %v837
          %v845 = vsel %vm666, %v842, %v838
          %v846 = vsel %vm667, %v842, %v839
          %v847 = vsel %vm668, %v842, %v840
          %v848 = vsel %vm669, %v842, %v841
          %v849 = vstv %s538
          %v850 = vsel %vm677, %v849, %v843
          %v851 = vsel %vm678, %v849, %v844
          %v852 = vsel %vm679, %v849, %v845
          %v853 = vsel %vm680, %v849, %v846
          %v854 = vsel %vm681, %v849, %v847
          %v855 = vsel %vm682, %v849, %v848
          %v856 = vstv %s587
          %v857 = vsel %vm690, %v856, %v850
          %v858 = vsel %vm691, %v856, %v851
          %v859 = vsel %vm692, %v856, %v852
          %v860 = vsel %vm693, %v856, %v853
          %v861 = vsel %vm694, %v856, %v854
          %v862 = vsel %vm695, %v856, %v855
          %v863 = vstv %s539
          %v864 = vsel %vm703, %v863, %v857
          %v865 = vsel %vm704, %v863, %v858
          %v866 = vsel %vm705, %v863, %v859
          %v867 = vsel %vm706, %v863, %v860
          %v868 = vsel %vm707, %v863, %v861
          %v869 = vsel %vm708, %v863, %v862
          %v870 = vstv %s588
          %v871 = vsel %vm716, %v870, %v864
          %v872 = vsel %vm717, %v870, %v865
          %v873 = vsel %vm718, %v870, %v866
          %v874 = vsel %vm719, %v870, %v867
          %v875 = vsel %vm720, %v870, %v868
          %v876 = vsel %vm721, %v870, %v869
          %v877 = vstv %s540
          %v878 = vsel %vm729, %v877, %v871
          %v879 = vsel %vm730, %v877, %v872
          %v880 = vsel %vm731, %v877, %v873
          %v881 = vsel %vm732, %v877, %v874
          %v882 = vsel %vm733, %v877, %v875
          %v883 = vsel %vm734, %v877, %v876
          %v884 = vstv %s589
          %v885 = vsel %vm742, %v884, %v878
          %v886 = vsel %vm743, %v884, %v879
          %v887 = vsel %vm744, %v884, %v880
          %v888 = vsel %vm745, %v884, %v881
          %v889 = vsel %vm746, %v884, %v882
          %v890 = vsel %vm747, %v884, %v883
          %v891 = vstv %s541
          %v892 = vsel %vm755, %v891, %v885
          %v893 = vsel %vm756, %v891, %v886
          %v894 = vsel %vm757, %v891, %v887
          %v895 = vsel %vm758, %v891, %v888
          %v896 = vsel %vm759, %v891, %v889
          %v897 = vsel %vm760, %v891, %v890
          %v898 = vstv %s590
          %v899 = vsel %vm768, %v898, %v892
          %v900 = vsel %vm769, %v898, %v893
          %v901 = vsel %vm770, %v898, %v894
          %v902 = vsel %vm771, %v898, %v895
          %v903 = vsel %vm772, %v898, %v896
          %v904 = vsel %vm773, %v898, %v897
          %v905 = vstv %s542
          %v906 = vsel %vm781, %v905, %v899
          %v907 = vsel %vm782, %v905, %v900
          %v908 = vsel %vm783, %v905, %v901
          %v909 = vsel %vm784, %v905, %v902
          %v910 = vsel %vm785, %v905, %v903
          %v911 = vsel %vm786, %v905, %v904
          %v912 = vstv %s591
          %v913 = vsel %vm794, %v912, %v906
          %v914 = vsel %vm795, %v912, %v907
          %v915 = vsel %vm796, %v912, %v908
          %v916 = vsel %vm797, %v912, %v909
          %v917 = vsel %vm798, %v912, %v910
          %v918 = vsel %vm799, %v912, %v911
          %v919 = vstv %s543
          %v920 = vsel %vm807, %v919, %v913
          %v921 = vsel %vm808, %v919, %v914
          %v922 = vsel %vm809, %v919, %v915
          %v923 = vsel %vm810, %v919, %v916
          %v924 = vsel %vm811, %v919, %v917
          %v925 = vsel %vm812, %v919, %v918
          %v926 = vstv %s592
          %v927 = vsel %vm820, %v926, %v920
          %v928 = vsel %vm821, %v926, %v921
          %v929 = vsel %vm822, %v926, %v922
          %v930 = vsel %vm823, %v926, %v923
          %v931 = vsel %vm824, %v926, %v924
          %v932 = vsel %vm825, %v926, %v925
          %vm933 = vcmask 359424
          %v935 = vsel %vm933, %v833, 0
          %v938 = vsel %vm933, %v834, 0
          %vm940 = vcmask 1043456
          %v942 = vsel %vm940, %v932, 0
          %944 = vmatpush.msra.mxu0 0.0
          %945 = vmatpush.msra.mxu0 0.0
          %946 = vmatpush.msra.mxu0 0.0
          %947 = vmatpush.msra.mxu0 0.0
          %948 = vmatpush.msra.mxu0 0.0
          %949 = vmatpush.msra.mxu0 0.0
          %950 = vmatpush.msra.mxu0 0.0
          %951 = vmatpush.msra.mxu0 0.0
          %952 = vmatpush.msra.mxu0 0.0
          %953 = vmatpush.msra.mxu0 0.0
          %954 = vmatpush.msra.mxu0 %v942
          %955 = vmatpush.msra.mxu0 %v931
          %956 = vmatpush.msra.mxu0 %v930
          %957 = vmatpush.msra.mxu0 %v929
          %958 = vmatpush.msra.mxu0 %v928
          %959 = vmatpush.msra.mxu0 %v927
          %960 = vmatmul.f32.gmra.mxu0 %v935
          %v961 = vpop.f32.mrf.mxu0
          %v962 = vadd.f32 0.0, %v961
          %963 = vmatmul.f32.gmra.mxu0 %v938
          %v964 = vpop.f32.mrf.mxu0
          %v965 = vadd.f32 0.0, %v964
          %966 = vdwg.mxu0
          %v968 = vsel %vm933, %v649, 0
          %v971 = vsel %vm933, %v650, 0
          %v974 = vsel %vm940, %v832, 0
          %976 = vmatpush.msra.mxu0 0.0
          %977 = vmatpush.msra.mxu0 0.0
          %978 = vmatpush.msra.mxu0 0.0
          %979 = vmatpush.msra.mxu0 0.0
          %980 = vmatpush.msra.mxu0 0.0
          %981 = vmatpush.msra.mxu0 0.0
          %982 = vmatpush.msra.mxu0 0.0
          %983 = vmatpush.msra.mxu0 0.0
          %984 = vmatpush.msra.mxu0 0.0
          %985 = vmatpush.msra.mxu0 0.0
          %986 = vmatpush.msra.mxu0 %v974
          %987 = vmatpush.msra.mxu0 %v831
          %988 = vmatpush.msra.mxu0 %v830
          %989 = vmatpush.msra.mxu0 %v829
          %990 = vmatpush.msra.mxu0 %v828
          %991 = vmatpush.msra.mxu0 %v827
          %992 = vmatmul.f32.gmra.mxu0 %v968
          %v993 = vpop.f32.mrf.mxu0
          %v994 = vadd.f32 %v962, %v993
          %995 = vmatmul.f32.gmra.mxu0 %v971
          %v996 = vpop.f32.mrf.mxu0
          %v997 = vadd.f32 %v965, %v996
          %998 = vdwg.mxu0
          %v999 = vld [vmem:[#allocation4 + $0x2] sm:$0xff]
          %v1000 = vld [vmem:[#allocation4 + $0xa] sm:$0xff]
          %v1001 = vstv %s544
          %v1002 = vsel %vm651, %v1001, 0.0
          %v1003 = vsel %vm652, %v1001, 0.0
          %v1004 = vsel %vm653, %v1001, 0.0
          %v1005 = vsel %vm654, %v1001, 0.0
          %v1006 = vsel %vm655, %v1001, 0.0
          %v1007 = vsel %vm656, %v1001, 0.0
          %v1008 = vstv %s593
          %v1009 = vsel %vm664, %v1008, %v1002
          %v1010 = vsel %vm665, %v1008, %v1003
          %v1011 = vsel %vm666, %v1008, %v1004
          %v1012 = vsel %vm667, %v1008, %v1005
          %v1013 = vsel %vm668, %v1008, %v1006
          %v1014 = vsel %vm669, %v1008, %v1007
          %v1015 = vstv %s545
          %v1016 = vsel %vm677, %v1015, %v1009
          %v1017 = vsel %vm678, %v1015, %v1010
          %v1018 = vsel %vm679, %v1015, %v1011
          %v1019 = vsel %vm680, %v1015, %v1012
          %v1020 = vsel %vm681, %v1015, %v1013
          %v1021 = vsel %vm682, %v1015, %v1014
          %v1022 = vstv %s594
          %v1023 = vsel %vm690, %v1022, %v1016
          %v1024 = vsel %vm691, %v1022, %v1017
          %v1025 = vsel %vm692, %v1022, %v1018
          %v1026 = vsel %vm693, %v1022, %v1019
          %v1027 = vsel %vm694, %v1022, %v1020
          %v1028 = vsel %vm695, %v1022, %v1021
          %v1029 = vstv %s546
          %v1030 = vsel %vm703, %v1029, %v1023
          %v1031 = vsel %vm704, %v1029, %v1024
          %v1032 = vsel %vm705, %v1029, %v1025
          %v1033 = vsel %vm706, %v1029, %v1026
          %v1034 = vsel %vm707, %v1029, %v1027
          %v1035 = vsel %vm708, %v1029, %v1028
          %v1036 = vstv %s595
          %v1037 = vsel %vm716, %v1036, %v1030
          %v1038 = vsel %vm717, %v1036, %v1031
          %v1039 = vsel %vm718, %v1036, %v1032
          %v1040 = vsel %vm719, %v1036, %v1033
          %v1041 = vsel %vm720, %v1036, %v1034
          %v1042 = vsel %vm721, %v1036, %v1035
          %v1043 = vstv %s547
          %v1044 = vsel %vm729, %v1043, %v1037
          %v1045 = vsel %vm730, %v1043, %v1038
          %v1046 = vsel %vm731, %v1043, %v1039
          %v1047 = vsel %vm732, %v1043, %v1040
          %v1048 = vsel %vm733, %v1043, %v1041
          %v1049 = vsel %vm734, %v1043, %v1042
          %v1050 = vstv %s596
          %v1051 = vsel %vm742, %v1050, %v1044
          %v1052 = vsel %vm743, %v1050, %v1045
          %v1053 = vsel %vm744, %v1050, %v1046
          %v1054 = vsel %vm745, %v1050, %v1047
          %v1055 = vsel %vm746, %v1050, %v1048
          %v1056 = vsel %vm747, %v1050, %v1049
          %v1057 = vstv %s548
          %v1058 = vsel %vm755, %v1057, %v1051
          %v1059 = vsel %vm756, %v1057, %v1052
          %v1060 = vsel %vm757, %v1057, %v1053
          %v1061 = vsel %vm758, %v1057, %v1054
          %v1062 = vsel %vm759, %v1057, %v1055
          %v1063 = vsel %vm760, %v1057, %v1056
          %v1064 = vstv %s597
          %v1065 = vsel %vm768, %v1064, %v1058
          %v1066 = vsel %vm769, %v1064, %v1059
          %v1067 = vsel %vm770, %v1064, %v1060
          %v1068 = vsel %vm771, %v1064, %v1061
          %v1069 = vsel %vm772, %v1064, %v1062
          %v1070 = vsel %vm773, %v1064, %v1063
          %v1071 = vstv %s549
          %v1072 = vsel %vm781, %v1071, %v1065
          %v1073 = vsel %vm782, %v1071, %v1066
          %v1074 = vsel %vm783, %v1071, %v1067
          %v1075 = vsel %vm784, %v1071, %v1068
          %v1076 = vsel %vm785, %v1071, %v1069
          %v1077 = vsel %vm786, %v1071, %v1070
          %v1078 = vstv %s598
          %v1079 = vsel %vm794, %v1078, %v1072
          %v1080 = vsel %vm795, %v1078, %v1073
          %v1081 = vsel %vm796, %v1078, %v1074
          %v1082 = vsel %vm797, %v1078, %v1075
          %v1083 = vsel %vm798, %v1078, %v1076
          %v1084 = vsel %vm799, %v1078, %v1077
          %v1085 = vstv %s550
          %v1086 = vsel %vm807, %v1085, %v1079
          %v1087 = vsel %vm808, %v1085, %v1080
          %v1088 = vsel %vm809, %v1085, %v1081
          %v1089 = vsel %vm810, %v1085, %v1082
          %v1090 = vsel %vm811, %v1085, %v1083
          %v1091 = vsel %vm812, %v1085, %v1084
          %v1092 = vstv %s599
          %v1093 = vsel %vm820, %v1092, %v1086
          %v1094 = vsel %vm821, %v1092, %v1087
          %v1095 = vsel %vm822, %v1092, %v1088
          %v1096 = vsel %vm823, %v1092, %v1089
          %v1097 = vsel %vm824, %v1092, %v1090
          %v1098 = vsel %vm825, %v1092, %v1091
          %v1100 = vsel %vm933, %v999, 0
          %v1103 = vsel %vm933, %v1000, 0
          %v1106 = vsel %vm940, %v1098, 0
          %1108 = vmatpush.msra.mxu0 0.0
          %1109 = vmatpush.msra.mxu0 0.0
          %1110 = vmatpush.msra.mxu0 0.0
          %1111 = vmatpush.msra.mxu0 0.0
          %1112 = vmatpush.msra.mxu0 0.0
          %1113 = vmatpush.msra.mxu0 0.0
          %1114 = vmatpush.msra.mxu0 0.0
          %1115 = vmatpush.msra.mxu0 0.0
          %1116 = vmatpush.msra.mxu0 0.0
          %1117 = vmatpush.msra.mxu0 0.0
          %1118 = vmatpush.msra.mxu0 %v1106
          %1119 = vmatpush.msra.mxu0 %v1097
          %1120 = vmatpush.msra.mxu0 %v1096
          %1121 = vmatpush.msra.mxu0 %v1095
          %1122 = vmatpush.msra.mxu0 %v1094
          %1123 = vmatpush.msra.mxu0 %v1093
          %1124 = vmatmul.f32.gmra.mxu0 %v1100
          %v1125 = vpop.f32.mrf.mxu0
          %v1126 = vadd.f32 0.0, %v1125
          %1127 = vmatmul.f32.gmra.mxu0 %v1103
          %v1128 = vpop.f32.mrf.mxu0
          %v1129 = vadd.f32 0.0, %v1128
          %1130 = vdwg.mxu0
          %v1131 = vadd.f32 %v994, %v1126
          %v1132 = vadd.f32 %v997, %v1129
          %v1133 = vld [vmem:[#allocation4 + $0x3] sm:$0xff]
          %v1134 = vld [vmem:[#allocation4 + $0xb] sm:$0xff]
          %v1135 = vstv %s551
          %v1136 = vsel %vm651, %v1135, 0.0
          %v1137 = vsel %vm652, %v1135, 0.0
          %v1138 = vsel %vm653, %v1135, 0.0
          %v1139 = vsel %vm654, %v1135, 0.0
          %v1140 = vsel %vm655, %v1135, 0.0
          %v1141 = vsel %vm656, %v1135, 0.0
          %v1142 = vstv %s600
          %v1143 = vsel %vm664, %v1142, %v1136
          %v1144 = vsel %vm665, %v1142, %v1137
          %v1145 = vsel %vm666, %v1142, %v1138
          %v1146 = vsel %vm667, %v1142, %v1139
          %v1147 = vsel %vm668, %v1142, %v1140
          %v1148 = vsel %vm669, %v1142, %v1141
          %v1149 = vstv %s552
          %v1150 = vsel %vm677, %v1149, %v1143
          %v1151 = vsel %vm678, %v1149, %v1144
          %v1152 = vsel %vm679, %v1149, %v1145
          %v1153 = vsel %vm680, %v1149, %v1146
          %v1154 = vsel %vm681, %v1149, %v1147
          %v1155 = vsel %vm682, %v1149, %v1148
          %v1156 = vstv %s601
          %v1157 = vsel %vm690, %v1156, %v1150
          %v1158 = vsel %vm691, %v1156, %v1151
          %v1159 = vsel %vm692, %v1156, %v1152
          %v1160 = vsel %vm693, %v1156, %v1153
          %v1161 = vsel %vm694, %v1156, %v1154
          %v1162 = vsel %vm695, %v1156, %v1155
          %v1163 = vstv %s553
          %v1164 = vsel %vm703, %v1163, %v1157
          %v1165 = vsel %vm704, %v1163, %v1158
          %v1166 = vsel %vm705, %v1163, %v1159
          %v1167 = vsel %vm706, %v1163, %v1160
          %v1168 = vsel %vm707, %v1163, %v1161
          %v1169 = vsel %vm708, %v1163, %v1162
          %v1170 = vstv %s602
          %v1171 = vsel %vm716, %v1170, %v1164
          %v1172 = vsel %vm717, %v1170, %v1165
          %v1173 = vsel %vm718, %v1170, %v1166
          %v1174 = vsel %vm719, %v1170, %v1167
          %v1175 = vsel %vm720, %v1170, %v1168
          %v1176 = vsel %vm721, %v1170, %v1169
          %v1177 = vstv %s554
          %v1178 = vsel %vm729, %v1177, %v1171
          %v1179 = vsel %vm730, %v1177, %v1172
          %v1180 = vsel %vm731, %v1177, %v1173
          %v1181 = vsel %vm732, %v1177, %v1174
          %v1182 = vsel %vm733, %v1177, %v1175
          %v1183 = vsel %vm734, %v1177, %v1176
          %v1184 = vstv %s603
          %v1185 = vsel %vm742, %v1184, %v1178
          %v1186 = vsel %vm743, %v1184, %v1179
          %v1187 = vsel %vm744, %v1184, %v1180
          %v1188 = vsel %vm745, %v1184, %v1181
          %v1189 = vsel %vm746, %v1184, %v1182
          %v1190 = vsel %vm747, %v1184, %v1183
          %v1191 = vstv %s555
          %v1192 = vsel %vm755, %v1191, %v1185
          %v1193 = vsel %vm756, %v1191, %v1186
          %v1194 = vsel %vm757, %v1191, %v1187
          %v1195 = vsel %vm758, %v1191, %v1188
          %v1196 = vsel %vm759, %v1191, %v1189
          %v1197 = vsel %vm760, %v1191, %v1190
          %v1198 = vstv %s604
          %v1199 = vsel %vm768, %v1198, %v1192
          %v1200 = vsel %vm769, %v1198, %v1193
          %v1201 = vsel %vm770, %v1198, %v1194
          %v1202 = vsel %vm771, %v1198, %v1195
          %v1203 = vsel %vm772, %v1198, %v1196
          %v1204 = vsel %vm773, %v1198, %v1197
          %v1205 = vstv %s556
          %v1206 = vsel %vm781, %v1205, %v1199
          %v1207 = vsel %vm782, %v1205, %v1200
          %v1208 = vsel %vm783, %v1205, %v1201
          %v1209 = vsel %vm784, %v1205, %v1202
          %v1210 = vsel %vm785, %v1205, %v1203
          %v1211 = vsel %vm786, %v1205, %v1204
          %v1212 = vstv %s605
          %v1213 = vsel %vm794, %v1212, %v1206
          %v1214 = vsel %vm795, %v1212, %v1207
          %v1215 = vsel %vm796, %v1212, %v1208
          %v1216 = vsel %vm797, %v1212, %v1209
          %v1217 = vsel %vm798, %v1212, %v1210
          %v1218 = vsel %vm799, %v1212, %v1211
          %v1219 = vstv %s557
          %v1220 = vsel %vm807, %v1219, %v1213
          %v1221 = vsel %vm808, %v1219, %v1214
          %v1222 = vsel %vm809, %v1219, %v1215
          %v1223 = vsel %vm810, %v1219, %v1216
          %v1224 = vsel %vm811, %v1219, %v1217
          %v1225 = vsel %vm812, %v1219, %v1218
          %v1226 = vstv %s606
          %v1227 = vsel %vm820, %v1226, %v1220
          %v1228 = vsel %vm821, %v1226, %v1221
          %v1229 = vsel %vm822, %v1226, %v1222
          %v1230 = vsel %vm823, %v1226, %v1223
          %v1231 = vsel %vm824, %v1226, %v1224
          %v1232 = vsel %vm825, %v1226, %v1225
          %v1234 = vsel %vm933, %v1133, 0
          %v1237 = vsel %vm933, %v1134, 0
          %v1240 = vsel %vm940, %v1232, 0
          %1242 = vmatpush.msra.mxu0 0.0
          %1243 = vmatpush.msra.mxu0 0.0
          %1244 = vmatpush.msra.mxu0 0.0
          %1245 = vmatpush.msra.mxu0 0.0
          %1246 = vmatpush.msra.mxu0 0.0
          %1247 = vmatpush.msra.mxu0 0.0
          %1248 = vmatpush.msra.mxu0 0.0
          %1249 = vmatpush.msra.mxu0 0.0
          %1250 = vmatpush.msra.mxu0 0.0
          %1251 = vmatpush.msra.mxu0 0.0
          %1252 = vmatpush.msra.mxu0 %v1240
          %1253 = vmatpush.msra.mxu0 %v1231
          %1254 = vmatpush.msra.mxu0 %v1230
          %1255 = vmatpush.msra.mxu0 %v1229
          %1256 = vmatpush.msra.mxu0 %v1228
          %1257 = vmatpush.msra.mxu0 %v1227
          %1258 = vmatmul.f32.gmra.mxu0 %v1234
          %v1259 = vpop.f32.mrf.mxu0
          %v1260 = vadd.f32 0.0, %v1259
          %1261 = vmatmul.f32.gmra.mxu0 %v1237
          %v1262 = vpop.f32.mrf.mxu0
          %v1263 = vadd.f32 0.0, %v1262
          %1264 = vdwg.mxu0
          %v1265 = vadd.f32 %v1131, %v1260
          %v1266 = vadd.f32 %v1132, %v1263
          %v1267 = vld [vmem:[#allocation4 + $0x4] sm:$0xff]
          %v1268 = vld [vmem:[#allocation4 + $0xc] sm:$0xff]
          %v1269 = vstv %s558
          %v1270 = vsel %vm651, %v1269, 0.0
          %v1271 = vsel %vm652, %v1269, 0.0
          %v1272 = vsel %vm653, %v1269, 0.0
          %v1273 = vsel %vm654, %v1269, 0.0
          %v1274 = vsel %vm655, %v1269, 0.0
          %v1275 = vsel %vm656, %v1269, 0.0
          %v1276 = vstv %s607
          %v1277 = vsel %vm664, %v1276, %v1270
          %v1278 = vsel %vm665, %v1276, %v1271
          %v1279 = vsel %vm666, %v1276, %v1272
          %v1280 = vsel %vm667, %v1276, %v1273
          %v1281 = vsel %vm668, %v1276, %v1274
          %v1282 = vsel %vm669, %v1276, %v1275
          %v1283 = vstv %s559
          %v1284 = vsel %vm677, %v1283, %v1277
          %v1285 = vsel %vm678, %v1283, %v1278
          %v1286 = vsel %vm679, %v1283, %v1279
          %v1287 = vsel %vm680, %v1283, %v1280
          %v1288 = vsel %vm681, %v1283, %v1281
          %v1289 = vsel %vm682, %v1283, %v1282
          %v1290 = vstv %s608
          %v1291 = vsel %vm690, %v1290, %v1284
          %v1292 = vsel %vm691, %v1290, %v1285
          %v1293 = vsel %vm692, %v1290, %v1286
          %v1294 = vsel %vm693, %v1290, %v1287
          %v1295 = vsel %vm694, %v1290, %v1288
          %v1296 = vsel %vm695, %v1290, %v1289
          %v1297 = vstv %s560
          %v1298 = vsel %vm703, %v1297, %v1291
          %v1299 = vsel %vm704, %v1297, %v1292
          %v1300 = vsel %vm705, %v1297, %v1293
          %v1301 = vsel %vm706, %v1297, %v1294
          %v1302 = vsel %vm707, %v1297, %v1295
          %v1303 = vsel %vm708, %v1297, %v1296
          %v1304 = vstv %s609
          %v1305 = vsel %vm716, %v1304, %v1298
          %v1306 = vsel %vm717, %v1304, %v1299
          %v1307 = vsel %vm718, %v1304, %v1300
          %v1308 = vsel %vm719, %v1304, %v1301
          %v1309 = vsel %vm720, %v1304, %v1302
          %v1310 = vsel %vm721, %v1304, %v1303
          %v1311 = vstv %s561
          %v1312 = vsel %vm729, %v1311, %v1305
          %v1313 = vsel %vm730, %v1311, %v1306
          %v1314 = vsel %vm731, %v1311, %v1307
          %v1315 = vsel %vm732, %v1311, %v1308
          %v1316 = vsel %vm733, %v1311, %v1309
          %v1317 = vsel %vm734, %v1311, %v1310
          %v1318 = vstv %s610
          %v1319 = vsel %vm742, %v1318, %v1312
          %v1320 = vsel %vm743, %v1318, %v1313
          %v1321 = vsel %vm744, %v1318, %v1314
          %v1322 = vsel %vm745, %v1318, %v1315
          %v1323 = vsel %vm746, %v1318, %v1316
          %v1324 = vsel %vm747, %v1318, %v1317
          %v1325 = vstv %s562
          %v1326 = vsel %vm755, %v1325, %v1319
          %v1327 = vsel %vm756, %v1325, %v1320
          %v1328 = vsel %vm757, %v1325, %v1321
          %v1329 = vsel %vm758, %v1325, %v1322
          %v1330 = vsel %vm759, %v1325, %v1323
          %v1331 = vsel %vm760, %v1325, %v1324
          %v1332 = vstv %s611
          %v1333 = vsel %vm768, %v1332, %v1326
          %v1334 = vsel %vm769, %v1332, %v1327
          %v1335 = vsel %vm770, %v1332, %v1328
          %v1336 = vsel %vm771, %v1332, %v1329
          %v1337 = vsel %vm772, %v1332, %v1330
          %v1338 = vsel %vm773, %v1332, %v1331
          %v1339 = vstv %s563
          %v1340 = vsel %vm781, %v1339, %v1333
          %v1341 = vsel %vm782, %v1339, %v1334
          %v1342 = vsel %vm783, %v1339, %v1335
          %v1343 = vsel %vm784, %v1339, %v1336
          %v1344 = vsel %vm785, %v1339, %v1337
          %v1345 = vsel %vm786, %v1339, %v1338
          %v1346 = vstv %s612
          %v1347 = vsel %vm794, %v1346, %v1340
          %v1348 = vsel %vm795, %v1346, %v1341
          %v1349 = vsel %vm796, %v1346, %v1342
          %v1350 = vsel %vm797, %v1346, %v1343
          %v1351 = vsel %vm798, %v1346, %v1344
          %v1352 = vsel %vm799, %v1346, %v1345
          %v1353 = vstv %s564
          %v1354 = vsel %vm807, %v1353, %v1347
          %v1355 = vsel %vm808, %v1353, %v1348
          %v1356 = vsel %vm809, %v1353, %v1349
          %v1357 = vsel %vm810, %v1353, %v1350
          %v1358 = vsel %vm811, %v1353, %v1351
          %v1359 = vsel %vm812, %v1353, %v1352
          %v1360 = vstv %s613
          %v1361 = vsel %vm820, %v1360, %v1354
          %v1362 = vsel %vm821, %v1360, %v1355
          %v1363 = vsel %vm822, %v1360, %v1356
          %v1364 = vsel %vm823, %v1360, %v1357
          %v1365 = vsel %vm824, %v1360, %v1358
          %v1366 = vsel %vm825, %v1360, %v1359
          %v1368 = vsel %vm933, %v1267, 0
          %v1371 = vsel %vm933, %v1268, 0
          %v1374 = vsel %vm940, %v1366, 0
          %1376 = vmatpush.msra.mxu0 0.0
          %1377 = vmatpush.msra.mxu0 0.0
          %1378 = vmatpush.msra.mxu0 0.0
          %1379 = vmatpush.msra.mxu0 0.0
          %1380 = vmatpush.msra.mxu0 0.0
          %1381 = vmatpush.msra.mxu0 0.0
          %1382 = vmatpush.msra.mxu0 0.0
          %1383 = vmatpush.msra.mxu0 0.0
          %1384 = vmatpush.msra.mxu0 0.0
          %1385 = vmatpush.msra.mxu0 0.0
          %1386 = vmatpush.msra.mxu0 %v1374
          %1387 = vmatpush.msra.mxu0 %v1365
          %1388 = vmatpush.msra.mxu0 %v1364
          %1389 = vmatpush.msra.mxu0 %v1363
          %1390 = vmatpush.msra.mxu0 %v1362
          %1391 = vmatpush.msra.mxu0 %v1361
          %1392 = vmatmul.f32.gmra.mxu0 %v1368
          %v1393 = vpop.f32.mrf.mxu0
          %v1394 = vadd.f32 0.0, %v1393
          %1395 = vmatmul.f32.gmra.mxu0 %v1371
          %v1396 = vpop.f32.mrf.mxu0
          %v1397 = vadd.f32 0.0, %v1396
          %1398 = vdwg.mxu0
          %v1399 = vadd.f32 %v1265, %v1394
          %v1400 = vadd.f32 %v1266, %v1397
          %v1401 = vld [vmem:[#allocation4 + $0x5] sm:$0xff]
          %v1402 = vld [vmem:[#allocation4 + $0xd] sm:$0xff]
          %v1403 = vstv %s565
          %v1404 = vsel %vm651, %v1403, 0.0
          %v1405 = vsel %vm652, %v1403, 0.0
          %v1406 = vsel %vm653, %v1403, 0.0
          %v1407 = vsel %vm654, %v1403, 0.0
          %v1408 = vsel %vm655, %v1403, 0.0
          %v1409 = vsel %vm656, %v1403, 0.0
          %v1410 = vstv %s614
          %v1411 = vsel %vm664, %v1410, %v1404
          %v1412 = vsel %vm665, %v1410, %v1405
          %v1413 = vsel %vm666, %v1410, %v1406
          %v1414 = vsel %vm667, %v1410, %v1407
          %v1415 = vsel %vm668, %v1410, %v1408
          %v1416 = vsel %vm669, %v1410, %v1409
          %v1417 = vstv %s566
          %v1418 = vsel %vm677, %v1417, %v1411
          %v1419 = vsel %vm678, %v1417, %v1412
          %v1420 = vsel %vm679, %v1417, %v1413
          %v1421 = vsel %vm680, %v1417, %v1414
          %v1422 = vsel %vm681, %v1417, %v1415
          %v1423 = vsel %vm682, %v1417, %v1416
          %v1424 = vstv %s615
          %v1425 = vsel %vm690, %v1424, %v1418
          %v1426 = vsel %vm691, %v1424, %v1419
          %v1427 = vsel %vm692, %v1424, %v1420
          %v1428 = vsel %vm693, %v1424, %v1421
          %v1429 = vsel %vm694, %v1424, %v1422
          %v1430 = vsel %vm695, %v1424, %v1423
          %v1431 = vstv %s567
          %v1432 = vsel %vm703, %v1431, %v1425
          %v1433 = vsel %vm704, %v1431, %v1426
          %v1434 = vsel %vm705, %v1431, %v1427
          %v1435 = vsel %vm706, %v1431, %v1428
          %v1436 = vsel %vm707, %v1431, %v1429
          %v1437 = vsel %vm708, %v1431, %v1430
          %v1438 = vstv %s616
          %v1439 = vsel %vm716, %v1438, %v1432
          %v1440 = vsel %vm717, %v1438, %v1433
          %v1441 = vsel %vm718, %v1438, %v1434
          %v1442 = vsel %vm719, %v1438, %v1435
          %v1443 = vsel %vm720, %v1438, %v1436
          %v1444 = vsel %vm721, %v1438, %v1437
          %v1445 = vstv %s568
          %v1446 = vsel %vm729, %v1445, %v1439
          %v1447 = vsel %vm730, %v1445, %v1440
          %v1448 = vsel %vm731, %v1445, %v1441
          %v1449 = vsel %vm732, %v1445, %v1442
          %v1450 = vsel %vm733, %v1445, %v1443
          %v1451 = vsel %vm734, %v1445, %v1444
          %v1452 = vstv %s617
          %v1453 = vsel %vm742, %v1452, %v1446
          %v1454 = vsel %vm743, %v1452, %v1447
          %v1455 = vsel %vm744, %v1452, %v1448
          %v1456 = vsel %vm745, %v1452, %v1449
          %v1457 = vsel %vm746, %v1452, %v1450
          %v1458 = vsel %vm747, %v1452, %v1451
          %v1459 = vstv %s569
          %v1460 = vsel %vm755, %v1459, %v1453
          %v1461 = vsel %vm756, %v1459, %v1454
          %v1462 = vsel %vm757, %v1459, %v1455
          %v1463 = vsel %vm758, %v1459, %v1456
          %v1464 = vsel %vm759, %v1459, %v1457
          %v1465 = vsel %vm760, %v1459, %v1458
          %v1466 = vstv %s618
          %v1467 = vsel %vm768, %v1466, %v1460
          %v1468 = vsel %vm769, %v1466, %v1461
          %v1469 = vsel %vm770, %v1466, %v1462
          %v1470 = vsel %vm771, %v1466, %v1463
          %v1471 = vsel %vm772, %v1466, %v1464
          %v1472 = vsel %vm773, %v1466, %v1465
          %v1473 = vstv %s570
          %v1474 = vsel %vm781, %v1473, %v1467
          %v1475 = vsel %vm782, %v1473, %v1468
          %v1476 = vsel %vm783, %v1473, %v1469
          %v1477 = vsel %vm784, %v1473, %v1470
          %v1478 = vsel %vm785, %v1473, %v1471
          %v1479 = vsel %vm786, %v1473, %v1472
          %v1480 = vstv %s619
          %v1481 = vsel %vm794, %v1480, %v1474
          %v1482 = vsel %vm795, %v1480, %v1475
          %v1483 = vsel %vm796, %v1480, %v1476
          %v1484 = vsel %vm797, %v1480, %v1477
          %v1485 = vsel %vm798, %v1480, %v1478
          %v1486 = vsel %vm799, %v1480, %v1479
          %v1487 = vstv %s571
          %v1488 = vsel %vm807, %v1487, %v1481
          %v1489 = vsel %vm808, %v1487, %v1482
          %v1490 = vsel %vm809, %v1487, %v1483
          %v1491 = vsel %vm810, %v1487, %v1484
          %v1492 = vsel %vm811, %v1487, %v1485
          %v1493 = vsel %vm812, %v1487, %v1486
          %v1494 = vstv %s620
          %v1495 = vsel %vm820, %v1494, %v1488
          %v1496 = vsel %vm821, %v1494, %v1489
          %v1497 = vsel %vm822, %v1494, %v1490
          %v1498 = vsel %vm823, %v1494, %v1491
          %v1499 = vsel %vm824, %v1494, %v1492
          %v1500 = vsel %vm825, %v1494, %v1493
          %v1502 = vsel %vm933, %v1401, 0
          %v1505 = vsel %vm933, %v1402, 0
          %v1508 = vsel %vm940, %v1500, 0
          %1510 = vmatpush.msra.mxu0 0.0
          %1511 = vmatpush.msra.mxu0 0.0
          %1512 = vmatpush.msra.mxu0 0.0
          %1513 = vmatpush.msra.mxu0 0.0
          %1514 = vmatpush.msra.mxu0 0.0
          %1515 = vmatpush.msra.mxu0 0.0
          %1516 = vmatpush.msra.mxu0 0.0
          %1517 = vmatpush.msra.mxu0 0.0
          %1518 = vmatpush.msra.mxu0 0.0
          %1519 = vmatpush.msra.mxu0 0.0
          %1520 = vmatpush.msra.mxu0 %v1508
          %1521 = vmatpush.msra.mxu0 %v1499
          %1522 = vmatpush.msra.mxu0 %v1498
          %1523 = vmatpush.msra.mxu0 %v1497
          %1524 = vmatpush.msra.mxu0 %v1496
          %1525 = vmatpush.msra.mxu0 %v1495
          %1526 = vmatmul.f32.gmra.mxu0 %v1502
          %v1527 = vpop.f32.mrf.mxu0
          %v1528 = vadd.f32 0.0, %v1527
          %1529 = vmatmul.f32.gmra.mxu0 %v1505
          %v1530 = vpop.f32.mrf.mxu0
          %v1531 = vadd.f32 0.0, %v1530
          %1532 = vdwg.mxu0
          %v1533 = vadd.f32 %v1399, %v1528
          %v1534 = vadd.f32 %v1400, %v1531
          %v1535 = vld [vmem:[#allocation4 + $0x6] sm:$0xff]
          %v1536 = vld [vmem:[#allocation4 + $0xe] sm:$0xff]
          %v1537 = vstv %s572
          %v1538 = vsel %vm651, %v1537, 0.0
          %v1539 = vsel %vm652, %v1537, 0.0
          %v1540 = vsel %vm653, %v1537, 0.0
          %v1541 = vsel %vm654, %v1537, 0.0
          %v1542 = vsel %vm655, %v1537, 0.0
          %v1543 = vsel %vm656, %v1537, 0.0
          %v1544 = vstv %s621
          %v1545 = vsel %vm664, %v1544, %v1538
          %v1546 = vsel %vm665, %v1544, %v1539
          %v1547 = vsel %vm666, %v1544, %v1540
          %v1548 = vsel %vm667, %v1544, %v1541
          %v1549 = vsel %vm668, %v1544, %v1542
          %v1550 = vsel %vm669, %v1544, %v1543
          %v1551 = vstv %s573
          %v1552 = vsel %vm677, %v1551, %v1545
          %v1553 = vsel %vm678, %v1551, %v1546
          %v1554 = vsel %vm679, %v1551, %v1547
          %v1555 = vsel %vm680, %v1551, %v1548
          %v1556 = vsel %vm681, %v1551, %v1549
          %v1557 = vsel %vm682, %v1551, %v1550
          %v1558 = vstv %s622
          %v1559 = vsel %vm690, %v1558, %v1552
          %v1560 = vsel %vm691, %v1558, %v1553
          %v1561 = vsel %vm692, %v1558, %v1554
          %v1562 = vsel %vm693, %v1558, %v1555
          %v1563 = vsel %vm694, %v1558, %v1556
          %v1564 = vsel %vm695, %v1558, %v1557
          %v1565 = vstv %s574
          %v1566 = vsel %vm703, %v1565, %v1559
          %v1567 = vsel %vm704, %v1565, %v1560
          %v1568 = vsel %vm705, %v1565, %v1561
          %v1569 = vsel %vm706, %v1565, %v1562
          %v1570 = vsel %vm707, %v1565, %v1563
          %v1571 = vsel %vm708, %v1565, %v1564
          %v1572 = vstv %s623
          %v1573 = vsel %vm716, %v1572, %v1566
          %v1574 = vsel %vm717, %v1572, %v1567
          %v1575 = vsel %vm718, %v1572, %v1568
          %v1576 = vsel %vm719, %v1572, %v1569
          %v1577 = vsel %vm720, %v1572, %v1570
          %v1578 = vsel %vm721, %v1572, %v1571
          %v1579 = vstv %s575
          %v1580 = vsel %vm729, %v1579, %v1573
          %v1581 = vsel %vm730, %v1579, %v1574
          %v1582 = vsel %vm731, %v1579, %v1575
          %v1583 = vsel %vm732, %v1579, %v1576
          %v1584 = vsel %vm733, %v1579, %v1577
          %v1585 = vsel %vm734, %v1579, %v1578
          %v1586 = vstv %s624
          %v1587 = vsel %vm742, %v1586, %v1580
          %v1588 = vsel %vm743, %v1586, %v1581
          %v1589 = vsel %vm744, %v1586, %v1582
          %v1590 = vsel %vm745, %v1586, %v1583
          %v1591 = vsel %vm746, %v1586, %v1584
          %v1592 = vsel %vm747, %v1586, %v1585
          %v1593 = vstv %s576
          %v1594 = vsel %vm755, %v1593, %v1587
          %v1595 = vsel %vm756, %v1593, %v1588
          %v1596 = vsel %vm757, %v1593, %v1589
          %v1597 = vsel %vm758, %v1593, %v1590
          %v1598 = vsel %vm759, %v1593, %v1591
          %v1599 = vsel %vm760, %v1593, %v1592
          %v1600 = vstv %s625
          %v1601 = vsel %vm768, %v1600, %v1594
          %v1602 = vsel %vm769, %v1600, %v1595
          %v1603 = vsel %vm770, %v1600, %v1596
          %v1604 = vsel %vm771, %v1600, %v1597
          %v1605 = vsel %vm772, %v1600, %v1598
          %v1606 = vsel %vm773, %v1600, %v1599
          %v1607 = vstv %s577
          %v1608 = vsel %vm781, %v1607, %v1601
          %v1609 = vsel %vm782, %v1607, %v1602
          %v1610 = vsel %vm783, %v1607, %v1603
          %v1611 = vsel %vm784, %v1607, %v1604
          %v1612 = vsel %vm785, %v1607, %v1605
          %v1613 = vsel %vm786, %v1607, %v1606
          %v1614 = vstv %s626
          %v1615 = vsel %vm794, %v1614, %v1608
          %v1616 = vsel %vm795, %v1614, %v1609
          %v1617 = vsel %vm796, %v1614, %v1610
          %v1618 = vsel %vm797, %v1614, %v1611
          %v1619 = vsel %vm798, %v1614, %v1612
          %v1620 = vsel %vm799, %v1614, %v1613
          %v1621 = vstv %s578
          %v1622 = vsel %vm807, %v1621, %v1615
          %v1623 = vsel %vm808, %v1621, %v1616
          %v1624 = vsel %vm809, %v1621, %v1617
          %v1625 = vsel %vm810, %v1621, %v1618
          %v1626 = vsel %vm811, %v1621, %v1619
          %v1627 = vsel %vm812, %v1621, %v1620
          %v1628 = vstv %s627
          %v1629 = vsel %vm820, %v1628, %v1622
          %v1630 = vsel %vm821, %v1628, %v1623
          %v1631 = vsel %vm822, %v1628, %v1624
          %v1632 = vsel %vm823, %v1628, %v1625
          %v1633 = vsel %vm824, %v1628, %v1626
          %v1634 = vsel %vm825, %v1628, %v1627
          %v1636 = vsel %vm933, %v1535, 0
          %v1639 = vsel %vm933, %v1536, 0
          %v1642 = vsel %vm940, %v1634, 0
          %1644 = vmatpush.msra.mxu0 0.0
          %1645 = vmatpush.msra.mxu0 0.0
          %1646 = vmatpush.msra.mxu0 0.0
          %1647 = vmatpush.msra.mxu0 0.0
          %1648 = vmatpush.msra.mxu0 0.0
          %1649 = vmatpush.msra.mxu0 0.0
          %1650 = vmatpush.msra.mxu0 0.0
          %1651 = vmatpush.msra.mxu0 0.0
          %1652 = vmatpush.msra.mxu0 0.0
          %1653 = vmatpush.msra.mxu0 0.0
          %1654 = vmatpush.msra.mxu0 %v1642
          %1655 = vmatpush.msra.mxu0 %v1633
          %1656 = vmatpush.msra.mxu0 %v1632
          %1657 = vmatpush.msra.mxu0 %v1631
          %1658 = vmatpush.msra.mxu0 %v1630
          %1659 = vmatpush.msra.mxu0 %v1629
          %1660 = vmatmul.f32.gmra.mxu0 %v1636
          %v1661 = vpop.f32.mrf.mxu0
          %v1662 = vadd.f32 0.0, %v1661
          %1663 = vmatmul.f32.gmra.mxu0 %v1639
          %v1664 = vpop.f32.mrf.mxu0
          %v1665 = vadd.f32 0.0, %v1664
          %1666 = vdwg.mxu0
          %v1667 = vadd.f32 %v1533, %v1662
          %v1668 = vadd.f32 %v1534, %v1665
          %v1669 = vxor.u32 %v1667, 2147483648
          %v1670 = vxor.u32 %v1668, 2147483648
          %v1671 = vmul.f32 %v1669, 1.442695
          %v1672 = vpow.pop %v1671
          %v1673 = vmul.f32 %v1670, 1.442695
          %v1674 = vpow.pop %v1673
          %v1675 = vadd.f32 %v1672, 1.0
          %v1676 = vadd.f32 %v1674, 1.0
          %v1677 = vrcp.pop %v1675
          %v1678 = vmul.f32 %v1675, %v1677
          %v1679 = vsub.f32 1.0, %v1678
          %v1680 = vmul.f32 %v1677, %v1679
          %v1681 = vadd.f32 %v1677, %v1680
          %vm1682 = vweird.f32 %v1675
          %vm1683 = vweird.f32 %v1677
          %vm1684 = vmor %vm1682, %vm1683
          %v1685 = vsel %vm1684, %v1677, %v1681
          %v1686 = vand.u32 2147483647, %v1675
          %vm1687 = vcmp.eq.f32.partialorder %v1686, 8.507059e+37
          %v1688 = vand.u32 %v1675, 2147483648
          %v1689 = vor.u32 1.1754944e-38, %v1688
          %v1690 = vsel %vm1687, %v1689, %v1685
          %v1691 = vmul.f32 1.0, %v1690
          %v1692 = vrcp.pop %v1676
          %v1693 = vmul.f32 %v1676, %v1692
          %v1694 = vsub.f32 1.0, %v1693
          %v1695 = vmul.f32 %v1692, %v1694
          %v1696 = vadd.f32 %v1692, %v1695
          %vm1697 = vweird.f32 %v1676
          %vm1698 = vweird.f32 %v1692
          %vm1699 = vmor %vm1697, %vm1698
          %v1700 = vsel %vm1699, %v1692, %v1696
          %v1701 = vand.u32 2147483647, %v1676
          %vm1702 = vcmp.eq.f32.partialorder %v1701, 8.507059e+37
          %v1703 = vand.u32 %v1676, 2147483648
          %v1704 = vor.u32 1.1754944e-38, %v1703
          %v1705 = vsel %vm1702, %v1704, %v1700
          %v1706 = vmul.f32 1.0, %v1705
          %vm1707 = vcmask 130048
          %1708 = vst.msk [vmem:[%s194] sm:$0xff] %vm1707, %v1691
          %1709 = vst.msk [vmem:[%s194 + $0x8] sm:$0xff] %vm1707, %v1706
        $region44: #{tpu_custom_call.1} parent=27 // pred_fallthru
          _
        %s1710 = sand.u32 %s89, 1
        %s1711 = scalar_lea.sflag [#allocation7], %s1710
        %s1712 = sand.u32 %s89, 1
        %s1713 = smul.addr %s1712, 16
        %s1714 = scalar_lea.vmem [#allocation10], %s1713
        // Predicated region
        $region45: #{tpu_custom_call.1} parent=27 // pred_check
          %p1715 = pneg %p99
        $region46: #{tpu_custom_call.1} parent=27 // pred_check_branch
          %1717 = sbr.rel (%p1715) target = $region48
        $region47: #{tpu_custom_call.1} parent=27 // pred_region
          %1719 = vsyncadd %s1711, 0
          %s1720 = smul.addr %s24, 2
          %s1721 = smul.addr %s1720, 8
          %s1722 = scalar_lea.hbm %s2, %s1721
          %s1723 = sshll.u32 %s1714, 4
          %s1724 = int_to_ptr.vmem [resolvable:$true] %s1723
          %s1725 = sshll.u32 %s1722, 4
          %s1726 = int_to_ptr.hbm [resolvable:$true] %s1725
          %1731 = dma.vmem_to_hbm [thread:$0]  %s1724, 256, %s1726, %s1711, 128, 128, 8
        $region48: #{tpu_custom_call.1} parent=27 // pred_fallthru
          _
      $region28: #{tpu_custom_call.1} parent=5 // pred_fallthru
        _
      %p1732 = scmp.le.s32.totalorder 2, %s15
      // Predicated region
      $region49: #{tpu_custom_call.1} parent=5 // pred_check
        %p1733 = pneg %p1732
      $region50: #{tpu_custom_call.1} parent=5 // pred_check_branch
        %1735 = sbr.rel (%p1733) target = $region52
      $region51: #{tpu_custom_call.1} parent=5 // pred_region
        %s1736 = ssub.s32 %s15, 2
        // Predicated region
        $region53: #{tpu_custom_call.1} parent=51 // pred_check
          %p1737 = pneg %p105
        $region54: #{tpu_custom_call.1} parent=51 // pred_check_branch
          %1739 = sbr.rel (%p1737) target = $region56
        $region55: #{tpu_custom_call.1} parent=51 // pred_region
          %s1740 = sand.u32 %s90, 1
          %s1741 = scalar_lea.sflag [#allocation7], %s1740
          %s1742 = sand.u32 %s90, 1
          %s1743 = smul.addr %s1742, 16
          %s1744 = scalar_lea.vmem [#allocation10], %s1743
          %1746 = dma.done %s1741, 256
        $region56: #{tpu_custom_call.1} parent=51 // pred_fallthru
          _
      $region52: #{tpu_custom_call.1} parent=5 // pred_fallthru
        _
    $region6: #{tpu_custom_call.1} parent=1 // loop_footer
      %s19 = sadd.s32 1, %s15
    $region7: #{tpu_custom_call.1} parent=1 // loop_footer_branch
      %14 = sbr.rel target = $region3
    $region8: #{tpu_custom_call.1} parent=1 // loop_exit
      _
    %1747 = vsyncpa [#allocation6], 1
    %s1748 = scalar_lea.sflag [#allocation6], 1
    %1749 = vsyncpa %s1748, 1
    %1750 = vsyncpa [#allocation7], 1
    %s1751 = scalar_lea.sflag [#allocation7], 1
    %1752 = vsyncpa %s1751, 1
    %1753 = vsyncpa [#allocation8], 1
    %s1754 = scalar_lea.sflag [#allocation8], 1
    %1755 = vsyncpa %s1754, 1

</llo_original>
